<compile_context>
chip_gen: v7x
topology: tpu7x:2x2x1
jax: 0.10.0
libtpu: 0.0.40
codegen_flags: <defaults>
</compile_context>

<pallas_src>
import numpy as np
import jax
import jax.numpy as jnp
from jax.experimental import pallas as pl
from jax.experimental.pallas import tpu as pltpu


def factor_conv_kernel(x_ref, a_ref, shift_ref, w1_ref, o_ref):
    """One grid step handles (TK output units) x (TN samples).

    x_ref:     (TN, CF)       bf16 flattened input block (CF = C*W)
    a_ref:     (CF, TK*D)     bf16 dense conv0 weights, transposed, lane-dense,
                              columns d-major within the block: col = dd*TK + t
    shift_ref: (1, TK*D)      f32 folded BN shift (same d-major column order)
    w1_ref:    (D*O, TK)      f32 conv1 (kernel_size=1) weights, row = dd*O + oo
    o_ref:     (O, TN, TK)    f32 output block (dense (TN, TK) store tiles)
    """
    # conv0 for all TK units at once: (TN, CF) x (CF, TK*D) on the MXU,
    # f32 accumulation.  Columns come out d-major: h[:, dd*TK + t].
    h = jax.lax.dot_general(
        x_ref[...], a_ref[...],
        dimension_numbers=(((1,), (0,)), ((), ())),
        preferred_element_type=jnp.float32)                  # (TN, D*TK) f32

    # Folded eval-mode BatchNorm shift + ReLU (scale already folded into A).
    # h stays f32 end-to-end.
    h = jnp.maximum(h + shift_ref[...], 0.0)

    # conv1 (kernel_size=1) as a VPU epilogue: D*O broadcast FMAs over TN rows.
    o_ch, tn, tk = o_ref.shape
    d = w1_ref.shape[0] // o_ch
    for oo in range(o_ch):
        acc = jnp.zeros((tn, tk), jnp.float32)
        for dd in range(d):
            row = dd * o_ch + oo
            w_row = w1_ref[row:row + 1, :]                   # (1, TK) f32
            acc = acc + h[:, dd * tk:(dd + 1) * tk] * w_row
        o_ref[oo, :, :] = acc


def factor_conv_forward(x_ncw, a_dense, bn_scale, bn_shift, w1,
                        *, block_n=None, block_k=128, vmem_limit_bytes=None):
    """FactorConv forward (eval mode).

    x_ncw:    (N, C, W)    input (PyTorch Conv1d NCW layout)
    a_dense:  (K, D, C*W)  dense conv0 weights with the projection gather
                           already scattered in
    bn_scale: (K, D)       gamma / sqrt(running_var + eps)
    bn_shift: (K, D)       beta - running_mean * bn_scale
    w1:       (K, O, D)    conv1 (kernel_size=1) weights
    returns:  (N, O, K)    PyTorch output layout (batch, out_channels, out_features)
    """
    n, c, w = x_ncw.shape
    k, d, cf = a_dense.shape
    o = w1.shape[1]
    assert cf == c * w
    if block_n is None:
        block_n = n if n <= 256 else 256
    assert n % block_n == 0, "batch must be divisible by block_n"
    assert k % block_k == 0, "out_features must be divisible by block_k"
    nb = k // block_k

    # ---- host-side weight prep (free at weight-load time) -----------------
    # Fold BN scale into A (f32), then build the transposed, lane-dense layout
    # A^T[cf, b*(D*TK) + dd*TK + t] = scale[b*TK+t, dd] * a_dense[b*TK+t, dd, cf].
    a_scaled = a_dense * bn_scale[:, :, None]                       # (K, D, CF) f32
    a_blocks = a_scaled.reshape(nb, block_k, d, cf)                 # (b, t, dd, cf)
    a_t = jnp.transpose(a_blocks, (3, 0, 2, 1)).reshape(cf, k * d)
    a_t = a_t.astype(jnp.bfloat16)

    # BN shift in the same d-major-within-block column order, kept f32.
    shift = jnp.transpose(bn_shift.reshape(nb, block_k, d),
                          (0, 2, 1)).reshape(1, k * d).astype(jnp.float32)

    # conv1 weights, raw (no block-diagonal inflation):
    #   w1flat[b, dd*O + oo, t] = w1[b*TK + t, oo, dd], kept f32.
    w1r = w1.reshape(nb, block_k, o, d)                             # (b, t, oo, dd)
    w1flat = jnp.transpose(w1r, (0, 3, 2, 1)).reshape(nb, d * o, block_k)
    w1flat = w1flat.astype(jnp.float32)

    x2 = x_ncw.reshape(n, cf).astype(jnp.bfloat16)

    # Grid: k tiles OUTER, n tiles INNER -> weight blocks stay VMEM-resident
    # across the whole n sweep; only the tiny x tile is re-streamed.
    out_onk = pl.pallas_call(
        factor_conv_kernel,
        out_shape=jax.ShapeDtypeStruct((o, n, k), jnp.float32),
        grid_spec=pltpu.PrefetchScalarGridSpec(
            num_scalar_prefetch=0,
            grid=(k // block_k, n // block_n),
            in_specs=[
                pl.BlockSpec((block_n, cf), lambda ki, ni: (ni, 0)),
                pl.BlockSpec((cf, block_k * d), lambda ki, ni: (0, ki)),
                pl.BlockSpec((1, block_k * d), lambda ki, ni: (0, ki)),
                pl.BlockSpec((None, d * o, block_k), lambda ki, ni: (ki, 0, 0)),
            ],
            out_specs=pl.BlockSpec((o, block_n, block_k),
                                   lambda ki, ni: (0, ni, ki)),
        ),
        compiler_params=pltpu.CompilerParams(
            dimension_semantics=("parallel", "parallel"),
            vmem_limit_bytes=vmem_limit_bytes),
    )(x2, a_t, shift, w1flat)

    # Back to the PyTorch (N, O, K) layout (tiny transpose in the wrapper).
    return jnp.transpose(out_onk, (1, 0, 2))


if __name__ == "__main__":
    N, C, W = 16, 2, 16       # batch, in_channels, input length (spatial)
    K = 256                   # out_features (number of factor units)
    D = 32                    # hidden_dim (unit conv0 out_channels)
    O = 2                     # out_channels
    EPS = 1e-5
    BLOCK_K = 128

    # projection: unit k reads a variable-length subset of input positions
    projection = {kk: [(3 * kk + j) % W for j in range(2 + (kk % 3))]
                  for kk in range(K)}
    LMAX = max(len(v) for v in projection.values())

    key = jax.random.PRNGKey(0)
    kx, kw0, kw1, kg, kb, km, kv = jax.random.split(key, 7)
    x = jax.random.normal(kx, (N, C, W), dtype=jnp.float32)

    # Per-unit parameters (shapes match the nn.Module units):
    #   conv0: (D, C, L_k) no bias ; BN1d(D) eval-mode stats ; conv1: (O, D) no bias
    w0_all = 0.1 * jax.random.normal(kw0, (K, D, C, LMAX), jnp.float32)
    w1 = 0.1 * jax.random.normal(kw1, (K, O, D), jnp.float32)
    gamma = 1.0 + 0.1 * jax.random.normal(kg, (K, D), jnp.float32)
    beta = 0.1 * jax.random.normal(kb, (K, D), jnp.float32)
    rmean = 0.1 * jax.random.normal(km, (K, D), jnp.float32)
    rvar = 1.0 + 0.5 * jax.random.uniform(kv, (K, D), jnp.float32)

    # Scatter per-unit conv0 weights into a dense (K, D, C*W) matrix so the
    # projection gather becomes part of the matmul.
    w0_np = np.asarray(w0_all)
    a_dense = np.zeros((K, D, C, W), np.float32)
    for kk, v in projection.items():
        for l, idx in enumerate(v):
            a_dense[kk, :, :, idx] += w0_np[kk, :, :, l]
    a_dense = jnp.asarray(a_dense.reshape(K, D, C * W))

    bn_scale = gamma / jnp.sqrt(rvar + EPS)
    bn_shift = beta - rmean * bn_scale

    out = factor_conv_forward(x, a_dense, bn_scale, bn_shift, w1,
                              block_k=BLOCK_K)
    out = jax.block_until_ready(out)
    assert out.shape == (N, O, K)

    # Pure-numpy reference following the original per-unit formulation.
    x_np = np.asarray(x)
    sc_np = np.asarray(bn_scale)
    sh_np = np.asarray(bn_shift)
    w1_np = np.asarray(w1)
    ref = np.zeros((N, O, K), np.float32)
    for kk, v in projection.items():
        xg = x_np[:, :, np.asarray(v)]                           # (N, C, L)
        h = np.einsum('ncl,dcl->nd', xg, w0_np[kk, :, :, :len(v)])
        h = np.maximum(h * sc_np[kk] + sh_np[kk], 0.0)           # eval-mode BN + ReLU
        ref[:, :, kk] = np.einsum('nd,od->no', h, w1_np[kk])

    # x / A streamed as bf16 (f32 accumulate, f32 epilogue) -> loosened tolerance.
    np.testing.assert_allclose(np.asarray(out), ref, rtol=2e-2, atol=2e-2)
    print("KERNEL_OK")
</pallas_src>

<mosaic_0001>
module attributes {stable_mosaic.version = 11 : i64} {
  func.func @factor_conv_kernel(%arg0: i32, %arg1: i32, %arg2: memref<16x32xbf16, #tpu.memory_space<vmem>>, %arg3: memref<32x4096xbf16, #tpu.memory_space<vmem>>, %arg4: memref<1x4096xf32, #tpu.memory_space<vmem>>, %arg5: memref<1x64x128xf32, #tpu.memory_space<vmem>>, %arg6: memref<2x16x128xf32, #tpu.memory_space<vmem>>) attributes {dimension_semantics = [#tpu.dimension_semantics<parallel>, #tpu.dimension_semantics<parallel>], iteration_bounds = array<i64: 2, 1>, scalar_prefetch = 0 : i64, scratch_operands = 0 : i64, tpu.core_type = #tpu.core_type<tc>, window_params = [{transform_indices = @transform_0, window_bounds = array<i64: 16, 32>}, {transform_indices = @transform_1, window_bounds = array<i64: 32, 4096>}, {transform_indices = @transform_2, window_bounds = array<i64: 1, 4096>}, {transform_indices = @transform_3, window_bounds = array<i64: 1, 64, 128>}, {transform_indices = @transform_4, window_bounds = array<i64: 2, 16, 128>}]} {
    %c0 = arith.constant 0 : index
    %c0_0 = arith.constant 0 : index
    %0 = vector.load %arg2[%c0, %c0_0] : memref<16x32xbf16, #tpu.memory_space<vmem>>, vector<16x32xbf16>
    %c0_1 = arith.constant 0 : index
    %c0_2 = arith.constant 0 : index
    %1 = vector.load %arg3[%c0_1, %c0_2] : memref<32x4096xbf16, #tpu.memory_space<vmem>>, vector<32x4096xbf16>
    %cst = arith.constant dense<0.000000e+00> : vector<16x4096xf32>
    %2 = tpu.matmul %0, %1, %cst {dimension_numbers = #tpu.dot_dimension_numbers<[1], [0], [0], [1], [0, 0, 1, 1], [], []>} : vector<16x32xbf16>, vector<32x4096xbf16>, vector<16x4096xf32> -> vector<16x4096xf32>
    %c0_3 = arith.constant 0 : index
    %c0_4 = arith.constant 0 : index
    %3 = vector.load %arg4[%c0_3, %c0_4] : memref<1x4096xf32, #tpu.memory_space<vmem>>, vector<1x4096xf32>
    %4 = vector.broadcast %3 : vector<1x4096xf32> to vector<16x4096xf32>
    %5 = arith.addf %2, %4 : vector<16x4096xf32>
    %cst_5 = arith.constant 0.000000e+00 : f32
    %6 = vector.broadcast %cst_5 : f32 to vector<16x4096xf32>
    %7 = arith.maximumf %5, %6 : vector<16x4096xf32>
    %cst_6 = arith.constant 0.000000e+00 : f32
    %8 = vector.broadcast %cst_6 : f32 to vector<16x128xf32>
    %c0_7 = arith.constant 0 : index
    %c0_8 = arith.constant 0 : index
    %c0_9 = arith.constant 0 : index
    %9 = vector.load %arg5[%c0_7, %c0_8, %c0_9] : memref<1x64x128xf32, #tpu.memory_space<vmem>>, vector<1x1x128xf32>
    %10 = vector.shape_cast %9 : vector<1x1x128xf32> to vector<1x128xf32>
    %11 = vector.extract_strided_slice %7 {offsets = [0, 0], sizes = [16, 128], strides = [1, 1]} : vector<16x4096xf32> to vector<16x128xf32>
    %12 = vector.broadcast %10 : vector<1x128xf32> to vector<16x128xf32>
    %13 = arith.mulf %11, %12 : vector<16x128xf32>
    %14 = arith.addf %8, %13 : vector<16x128xf32>
    %c0_10 = arith.constant 0 : index
    %c2 = arith.constant 2 : index
    %c0_11 = arith.constant 0 : index
    %15 = vector.load %arg5[%c0_10, %c2, %c0_11] : memref<1x64x128xf32, #tpu.memory_space<vmem>>, vector<1x1x128xf32>
    %16 = vector.shape_cast %15 : vector<1x1x128xf32> to vector<1x128xf32>
    %17 = vector.extract_strided_slice %7 {offsets = [0, 128], sizes = [16, 128], strides = [1, 1]} : vector<16x4096xf32> to vector<16x128xf32>
    %18 = vector.broadcast %16 : vector<1x128xf32> to vector<16x128xf32>
    %19 = arith.mulf %17, %18 : vector<16x128xf32>
    %20 = arith.addf %14, %19 : vector<16x128xf32>
    %c0_12 = arith.constant 0 : index
    %c4 = arith.constant 4 : index
    %c0_13 = arith.constant 0 : index
    %21 = vector.load %arg5[%c0_12, %c4, %c0_13] : memref<1x64x128xf32, #tpu.memory_space<vmem>>, vector<1x1x128xf32>
    %22 = vector.shape_cast %21 : vector<1x1x128xf32> to vector<1x128xf32>
    %23 = vector.extract_strided_slice %7 {offsets = [0, 256], sizes = [16, 128], strides = [1, 1]} : vector<16x4096xf32> to vector<16x128xf32>
    %24 = vector.broadcast %22 : vector<1x128xf32> to vector<16x128xf32>
    %25 = arith.mulf %23, %24 : vector<16x128xf32>
    %26 = arith.addf %20, %25 : vector<16x128xf32>
    %c0_14 = arith.constant 0 : index
    %c6 = arith.constant 6 : index
    %c0_15 = arith.constant 0 : index
    %27 = vector.load %arg5[%c0_14, %c6, %c0_15] : memref<1x64x128xf32, #tpu.memory_space<vmem>>, vector<1x1x128xf32>
    %28 = vector.shape_cast %27 : vector<1x1x128xf32> to vector<1x128xf32>
    %29 = vector.extract_strided_slice %7 {offsets = [0, 384], sizes = [16, 128], strides = [1, 1]} : vector<16x4096xf32> to vector<16x128xf32>
    %30 = vector.broadcast %28 : vector<1x128xf32> to vector<16x128xf32>
    %31 = arith.mulf %29, %30 : vector<16x128xf32>
    %32 = arith.addf %26, %31 : vector<16x128xf32>
    %c0_16 = arith.constant 0 : index
    %c8 = arith.constant 8 : index
    %c0_17 = arith.constant 0 : index
    %33 = vector.load %arg5[%c0_16, %c8, %c0_17] : memref<1x64x128xf32, #tpu.memory_space<vmem>>, vector<1x1x128xf32>
    %34 = vector.shape_cast %33 : vector<1x1x128xf32> to vector<1x128xf32>
    %35 = vector.extract_strided_slice %7 {offsets = [0, 512], sizes = [16, 128], strides = [1, 1]} : vector<16x4096xf32> to vector<16x128xf32>
    %36 = vector.broadcast %34 : vector<1x128xf32> to vector<16x128xf32>
    %37 = arith.mulf %35, %36 : vector<16x128xf32>
    %38 = arith.addf %32, %37 : vector<16x128xf32>
    %c0_18 = arith.constant 0 : index
    %c10 = arith.constant 10 : index
    %c0_19 = arith.constant 0 : index
    %39 = vector.load %arg5[%c0_18, %c10, %c0_19] : memref<1x64x128xf32, #tpu.memory_space<vmem>>, vector<1x1x128xf32>
    %40 = vector.shape_cast %39 : vector<1x1x128xf32> to vector<1x128xf32>
    %41 = vector.extract_strided_slice %7 {offsets = [0, 640], sizes = [16, 128], strides = [1, 1]} : vector<16x4096xf32> to vector<16x128xf32>
    %42 = vector.broadcast %40 : vector<1x128xf32> to vector<16x128xf32>
    %43 = arith.mulf %41, %42 : vector<16x128xf32>
    %44 = arith.addf %38, %43 : vector<16x128xf32>
    %c0_20 = arith.constant 0 : index
    %c12 = arith.constant 12 : index
    %c0_21 = arith.constant 0 : index
    %45 = vector.load %arg5[%c0_20, %c12, %c0_21] : memref<1x64x128xf32, #tpu.memory_space<vmem>>, vector<1x1x128xf32>
    %46 = vector.shape_cast %45 : vector<1x1x128xf32> to vector<1x128xf32>
    %47 = vector.extract_strided_slice %7 {offsets = [0, 768], sizes = [16, 128], strides = [1, 1]} : vector<16x4096xf32> to vector<16x128xf32>
    %48 = vector.broadcast %46 : vector<1x128xf32> to vector<16x128xf32>
    %49 = arith.mulf %47, %48 : vector<16x128xf32>
    %50 = arith.addf %44, %49 : vector<16x128xf32>
    %c0_22 = arith.constant 0 : index
    %c14 = arith.constant 14 : index
    %c0_23 = arith.constant 0 : index
    %51 = vector.load %arg5[%c0_22, %c14, %c0_23] : memref<1x64x128xf32, #tpu.memory_space<vmem>>, vector<1x1x128xf32>
    %52 = vector.shape_cast %51 : vector<1x1x128xf32> to vector<1x128xf32>
    %53 = vector.extract_strided_slice %7 {offsets = [0, 896], sizes = [16, 128], strides = [1, 1]} : vector<16x4096xf32> to vector<16x128xf32>
    %54 = vector.broadcast %52 : vector<1x128xf32> to vector<16x128xf32>
    %55 = arith.mulf %53, %54 : vector<16x128xf32>
    %56 = arith.addf %50, %55 : vector<16x128xf32>
    %c0_24 = arith.constant 0 : index
    %c16 = arith.constant 16 : index
    %c0_25 = arith.constant 0 : index
    %57 = vector.load %arg5[%c0_24, %c16, %c0_25] : memref<1x64x128xf32, #tpu.memory_space<vmem>>, vector<1x1x128xf32>
    %58 = vector.shape_cast %57 : vector<1x1x128xf32> to vector<1x128xf32>
    %59 = vector.extract_strided_slice %7 {offsets = [0, 1024], sizes = [16, 128], strides = [1, 1]} : vector<16x4096xf32> to vector<16x128xf32>
    %60 = vector.broadcast %58 : vector<1x128xf32> to vector<16x128xf32>
    %61 = arith.mulf %59, %60 : vector<16x128xf32>
    %62 = arith.addf %56, %61 : vector<16x128xf32>
    %c0_26 = arith.constant 0 : index
    %c18 = arith.constant 18 : index
    %c0_27 = arith.constant 0 : index
    %63 = vector.load %arg5[%c0_26, %c18, %c0_27] : memref<1x64x128xf32, #tpu.memory_space<vmem>>, vector<1x1x128xf32>
    %64 = vector.shape_cast %63 : vector<1x1x128xf32> to vector<1x128xf32>
    %65 = vector.extract_strided_slice %7 {offsets = [0, 1152], sizes = [16, 128], strides = [1, 1]} : vector<16x4096xf32> to vector<16x128xf32>
    %66 = vector.broadcast %64 : vector<1x128xf32> to vector<16x128xf32>
    %67 = arith.mulf %65, %66 : vector<16x128xf32>
    %68 = arith.addf %62, %67 : vector<16x128xf32>
    %c0_28 = arith.constant 0 : index
    %c20 = arith.constant 20 : index
    %c0_29 = arith.constant 0 : index
    %69 = vector.load %arg5[%c0_28, %c20, %c0_29] : memref<1x64x128xf32, #tpu.memory_space<vmem>>, vector<1x1x128xf32>
    %70 = vector.shape_cast %69 : vector<1x1x128xf32> to vector<1x128xf32>
    %71 = vector.extract_strided_slice %7 {offsets = [0, 1280], sizes = [16, 128], strides = [1, 1]} : vector<16x4096xf32> to vector<16x128xf32>
    %72 = vector.broadcast %70 : vector<1x128xf32> to vector<16x128xf32>
    %73 = arith.mulf %71, %72 : vector<16x128xf32>
    %74 = arith.addf %68, %73 : vector<16x128xf32>
    %c0_30 = arith.constant 0 : index
    %c22 = arith.constant 22 : index
    %c0_31 = arith.constant 0 : index
    %75 = vector.load %arg5[%c0_30, %c22, %c0_31] : memref<1x64x128xf32, #tpu.memory_space<vmem>>, vector<1x1x128xf32>
    %76 = vector.shape_cast %75 : vector<1x1x128xf32> to vector<1x128xf32>
    %77 = vector.extract_strided_slice %7 {offsets = [0, 1408], sizes = [16, 128], strides = [1, 1]} : vector<16x4096xf32> to vector<16x128xf32>
    %78 = vector.broadcast %76 : vector<1x128xf32> to vector<16x128xf32>
    %79 = arith.mulf %77, %78 : vector<16x128xf32>
    %80 = arith.addf %74, %79 : vector<16x128xf32>
    %c0_32 = arith.constant 0 : index
    %c24 = arith.constant 24 : index
    %c0_33 = arith.constant 0 : index
    %81 = vector.load %arg5[%c0_32, %c24, %c0_33] : memref<1x64x128xf32, #tpu.memory_space<vmem>>, vector<1x1x128xf32>
    %82 = vector.shape_cast %81 : vector<1x1x128xf32> to vector<1x128xf32>
    %83 = vector.extract_strided_slice %7 {offsets = [0, 1536], sizes = [16, 128], strides = [1, 1]} : vector<16x4096xf32> to vector<16x128xf32>
    %84 = vector.broadcast %82 : vector<1x128xf32> to vector<16x128xf32>
    %85 = arith.mulf %83, %84 : vector<16x128xf32>
    %86 = arith.addf %80, %85 : vector<16x128xf32>
    %c0_34 = arith.constant 0 : index
    %c26 = arith.constant 26 : index
    %c0_35 = arith.constant 0 : index
    %87 = vector.load %arg5[%c0_34, %c26, %c0_35] : memref<1x64x128xf32, #tpu.memory_space<vmem>>, vector<1x1x128xf32>
    %88 = vector.shape_cast %87 : vector<1x1x128xf32> to vector<1x128xf32>
    %89 = vector.extract_strided_slice %7 {offsets = [0, 1664], sizes = [16, 128], strides = [1, 1]} : vector<16x4096xf32> to vector<16x128xf32>
    %90 = vector.broadcast %88 : vector<1x128xf32> to vector<16x128xf32>
    %91 = arith.mulf %89, %90 : vector<16x128xf32>
    %92 = arith.addf %86, %91 : vector<16x128xf32>
    %c0_36 = arith.constant 0 : index
    %c28 = arith.constant 28 : index
    %c0_37 = arith.constant 0 : index
    %93 = vector.load %arg5[%c0_36, %c28, %c0_37] : memref<1x64x128xf32, #tpu.memory_space<vmem>>, vector<1x1x128xf32>
    %94 = vector.shape_cast %93 : vector<1x1x128xf32> to vector<1x128xf32>
    %95 = vector.extract_strided_slice %7 {offsets = [0, 1792], sizes = [16, 128], strides = [1, 1]} : vector<16x4096xf32> to vector<16x128xf32>
    %96 = vector.broadcast %94 : vector<1x128xf32> to vector<16x128xf32>
    %97 = arith.mulf %95, %96 : vector<16x128xf32>
    %98 = arith.addf %92, %97 : vector<16x128xf32>
    %c0_38 = arith.constant 0 : index
    %c30 = arith.constant 30 : index
    %c0_39 = arith.constant 0 : index
    %99 = vector.load %arg5[%c0_38, %c30, %c0_39] : memref<1x64x128xf32, #tpu.memory_space<vmem>>, vector<1x1x128xf32>
    %100 = vector.shape_cast %99 : vector<1x1x128xf32> to vector<1x128xf32>
    %101 = vector.extract_strided_slice %7 {offsets = [0, 1920], sizes = [16, 128], strides = [1, 1]} : vector<16x4096xf32> to vector<16x128xf32>
    %102 = vector.broadcast %100 : vector<1x128xf32> to vector<16x128xf32>
    %103 = arith.mulf %101, %102 : vector<16x128xf32>
    %104 = arith.addf %98, %103 : vector<16x128xf32>
    %c0_40 = arith.constant 0 : index
    %c32 = arith.constant 32 : index
    %c0_41 = arith.constant 0 : index
    %105 = vector.load %arg5[%c0_40, %c32, %c0_41] : memref<1x64x128xf32, #tpu.memory_space<vmem>>, vector<1x1x128xf32>
    %106 = vector.shape_cast %105 : vector<1x1x128xf32> to vector<1x128xf32>
    %107 = vector.extract_strided_slice %7 {offsets = [0, 2048], sizes = [16, 128], strides = [1, 1]} : vector<16x4096xf32> to vector<16x128xf32>
    %108 = vector.broadcast %106 : vector<1x128xf32> to vector<16x128xf32>
    %109 = arith.mulf %107, %108 : vector<16x128xf32>
    %110 = arith.addf %104, %109 : vector<16x128xf32>
    %c0_42 = arith.constant 0 : index
    %c34 = arith.constant 34 : index
    %c0_43 = arith.constant 0 : index
    %111 = vector.load %arg5[%c0_42, %c34, %c0_43] : memref<1x64x128xf32, #tpu.memory_space<vmem>>, vector<1x1x128xf32>
    %112 = vector.shape_cast %111 : vector<1x1x128xf32> to vector<1x128xf32>
    %113 = vector.extract_strided_slice %7 {offsets = [0, 2176], sizes = [16, 128], strides = [1, 1]} : vector<16x4096xf32> to vector<16x128xf32>
    %114 = vector.broadcast %112 : vector<1x128xf32> to vector<16x128xf32>
    %115 = arith.mulf %113, %114 : vector<16x128xf32>
    %116 = arith.addf %110, %115 : vector<16x128xf32>
    %c0_44 = arith.constant 0 : index
    %c36 = arith.constant 36 : index
    %c0_45 = arith.constant 0 : index
    %117 = vector.load %arg5[%c0_44, %c36, %c0_45] : memref<1x64x128xf32, #tpu.memory_space<vmem>>, vector<1x1x128xf32>
    %118 = vector.shape_cast %117 : vector<1x1x128xf32> to vector<1x128xf32>
    %119 = vector.extract_strided_slice %7 {offsets = [0, 2304], sizes = [16, 128], strides = [1, 1]} : vector<16x4096xf32> to vector<16x128xf32>
    %120 = vector.broadcast %118 : vector<1x128xf32> to vector<16x128xf32>
    %121 = arith.mulf %119, %120 : vector<16x128xf32>
    %122 = arith.addf %116, %121 : vector<16x128xf32>
    %c0_46 = arith.constant 0 : index
    %c38 = arith.constant 38 : index
    %c0_47 = arith.constant 0 : index
    %123 = vector.load %arg5[%c0_46, %c38, %c0_47] : memref<1x64x128xf32, #tpu.memory_space<vmem>>, vector<1x1x128xf32>
    %124 = vector.shape_cast %123 : vector<1x1x128xf32> to vector<1x128xf32>
    %125 = vector.extract_strided_slice %7 {offsets = [0, 2432], sizes = [16, 128], strides = [1, 1]} : vector<16x4096xf32> to vector<16x128xf32>
    %126 = vector.broadcast %124 : vector<1x128xf32> to vector<16x128xf32>
    %127 = arith.mulf %125, %126 : vector<16x128xf32>
    %128 = arith.addf %122, %127 : vector<16x128xf32>
    %c0_48 = arith.constant 0 : index
    %c40 = arith.constant 40 : index
    %c0_49 = arith.constant 0 : index
    %129 = vector.load %arg5[%c0_48, %c40, %c0_49] : memref<1x64x128xf32, #tpu.memory_space<vmem>>, vector<1x1x128xf32>
    %130 = vector.shape_cast %129 : vector<1x1x128xf32> to vector<1x128xf32>
    %131 = vector.extract_strided_slice %7 {offsets = [0, 2560], sizes = [16, 128], strides = [1, 1]} : vector<16x4096xf32> to vector<16x128xf32>
    %132 = vector.broadcast %130 : vector<1x128xf32> to vector<16x128xf32>
    %133 = arith.mulf %131, %132 : vector<16x128xf32>
    %134 = arith.addf %128, %133 : vector<16x128xf32>
    %c0_50 = arith.constant 0 : index
    %c42 = arith.constant 42 : index
    %c0_51 = arith.constant 0 : index
    %135 = vector.load %arg5[%c0_50, %c42, %c0_51] : memref<1x64x128xf32, #tpu.memory_space<vmem>>, vector<1x1x128xf32>
    %136 = vector.shape_cast %135 : vector<1x1x128xf32> to vector<1x128xf32>
    %137 = vector.extract_strided_slice %7 {offsets = [0, 2688], sizes = [16, 128], strides = [1, 1]} : vector<16x4096xf32> to vector<16x128xf32>
    %138 = vector.broadcast %136 : vector<1x128xf32> to vector<16x128xf32>
    %139 = arith.mulf %137, %138 : vector<16x128xf32>
    %140 = arith.addf %134, %139 : vector<16x128xf32>
    %c0_52 = arith.constant 0 : index
    %c44 = arith.constant 44 : index
    %c0_53 = arith.constant 0 : index
    %141 = vector.load %arg5[%c0_52, %c44, %c0_53] : memref<1x64x128xf32, #tpu.memory_space<vmem>>, vector<1x1x128xf32>
    %142 = vector.shape_cast %141 : vector<1x1x128xf32> to vector<1x128xf32>
    %143 = vector.extract_strided_slice %7 {offsets = [0, 2816], sizes = [16, 128], strides = [1, 1]} : vector<16x4096xf32> to vector<16x128xf32>
    %144 = vector.broadcast %142 : vector<1x128xf32> to vector<16x128xf32>
    %145 = arith.mulf %143, %144 : vector<16x128xf32>
    %146 = arith.addf %140, %145 : vector<16x128xf32>
    %c0_54 = arith.constant 0 : index
    %c46 = arith.constant 46 : index
    %c0_55 = arith.constant 0 : index
    %147 = vector.load %arg5[%c0_54, %c46, %c0_55] : memref<1x64x128xf32, #tpu.memory_space<vmem>>, vector<1x1x128xf32>
    %148 = vector.shape_cast %147 : vector<1x1x128xf32> to vector<1x128xf32>
    %149 = vector.extract_strided_slice %7 {offsets = [0, 2944], sizes = [16, 128], strides = [1, 1]} : vector<16x4096xf32> to vector<16x128xf32>
    %150 = vector.broadcast %148 : vector<1x128xf32> to vector<16x128xf32>
    %151 = arith.mulf %149, %150 : vector<16x128xf32>
    %152 = arith.addf %146, %151 : vector<16x128xf32>
    %c0_56 = arith.constant 0 : index
    %c48 = arith.constant 48 : index
    %c0_57 = arith.constant 0 : index
    %153 = vector.load %arg5[%c0_56, %c48, %c0_57] : memref<1x64x128xf32, #tpu.memory_space<vmem>>, vector<1x1x128xf32>
    %154 = vector.shape_cast %153 : vector<1x1x128xf32> to vector<1x128xf32>
    %155 = vector.extract_strided_slice %7 {offsets = [0, 3072], sizes = [16, 128], strides = [1, 1]} : vector<16x4096xf32> to vector<16x128xf32>
    %156 = vector.broadcast %154 : vector<1x128xf32> to vector<16x128xf32>
    %157 = arith.mulf %155, %156 : vector<16x128xf32>
    %158 = arith.addf %152, %157 : vector<16x128xf32>
    %c0_58 = arith.constant 0 : index
    %c50 = arith.constant 50 : index
    %c0_59 = arith.constant 0 : index
    %159 = vector.load %arg5[%c0_58, %c50, %c0_59] : memref<1x64x128xf32, #tpu.memory_space<vmem>>, vector<1x1x128xf32>
    %160 = vector.shape_cast %159 : vector<1x1x128xf32> to vector<1x128xf32>
    %161 = vector.extract_strided_slice %7 {offsets = [0, 3200], sizes = [16, 128], strides = [1, 1]} : vector<16x4096xf32> to vector<16x128xf32>
    %162 = vector.broadcast %160 : vector<1x128xf32> to vector<16x128xf32>
    %163 = arith.mulf %161, %162 : vector<16x128xf32>
    %164 = arith.addf %158, %163 : vector<16x128xf32>
    %c0_60 = arith.constant 0 : index
    %c52 = arith.constant 52 : index
    %c0_61 = arith.constant 0 : index
    %165 = vector.load %arg5[%c0_60, %c52, %c0_61] : memref<1x64x128xf32, #tpu.memory_space<vmem>>, vector<1x1x128xf32>
    %166 = vector.shape_cast %165 : vector<1x1x128xf32> to vector<1x128xf32>
    %167 = vector.extract_strided_slice %7 {offsets = [0, 3328], sizes = [16, 128], strides = [1, 1]} : vector<16x4096xf32> to vector<16x128xf32>
    %168 = vector.broadcast %166 : vector<1x128xf32> to vector<16x128xf32>
    %169 = arith.mulf %167, %168 : vector<16x128xf32>
    %170 = arith.addf %164, %169 : vector<16x128xf32>
    %c0_62 = arith.constant 0 : index
    %c54 = arith.constant 54 : index
    %c0_63 = arith.constant 0 : index
    %171 = vector.load %arg5[%c0_62, %c54, %c0_63] : memref<1x64x128xf32, #tpu.memory_space<vmem>>, vector<1x1x128xf32>
    %172 = vector.shape_cast %171 : vector<1x1x128xf32> to vector<1x128xf32>
    %173 = vector.extract_strided_slice %7 {offsets = [0, 3456], sizes = [16, 128], strides = [1, 1]} : vector<16x4096xf32> to vector<16x128xf32>
    %174 = vector.broadcast %172 : vector<1x128xf32> to vector<16x128xf32>
    %175 = arith.mulf %173, %174 : vector<16x128xf32>
    %176 = arith.addf %170, %175 : vector<16x128xf32>
    %c0_64 = arith.constant 0 : index
    %c56 = arith.constant 56 : index
    %c0_65 = arith.constant 0 : index
    %177 = vector.load %arg5[%c0_64, %c56, %c0_65] : memref<1x64x128xf32, #tpu.memory_space<vmem>>, vector<1x1x128xf32>
    %178 = vector.shape_cast %177 : vector<1x1x128xf32> to vector<1x128xf32>
    %179 = vector.extract_strided_slice %7 {offsets = [0, 3584], sizes = [16, 128], strides = [1, 1]} : vector<16x4096xf32> to vector<16x128xf32>
    %180 = vector.broadcast %178 : vector<1x128xf32> to vector<16x128xf32>
    %181 = arith.mulf %179, %180 : vector<16x128xf32>
    %182 = arith.addf %176, %181 : vector<16x128xf32>
    %c0_66 = arith.constant 0 : index
    %c58 = arith.constant 58 : index
    %c0_67 = arith.constant 0 : index
    %183 = vector.load %arg5[%c0_66, %c58, %c0_67] : memref<1x64x128xf32, #tpu.memory_space<vmem>>, vector<1x1x128xf32>
    %184 = vector.shape_cast %183 : vector<1x1x128xf32> to vector<1x128xf32>
    %185 = vector.extract_strided_slice %7 {offsets = [0, 3712], sizes = [16, 128], strides = [1, 1]} : vector<16x4096xf32> to vector<16x128xf32>
    %186 = vector.broadcast %184 : vector<1x128xf32> to vector<16x128xf32>
    %187 = arith.mulf %185, %186 : vector<16x128xf32>
    %188 = arith.addf %182, %187 : vector<16x128xf32>
    %c0_68 = arith.constant 0 : index
    %c60 = arith.constant 60 : index
    %c0_69 = arith.constant 0 : index
    %189 = vector.load %arg5[%c0_68, %c60, %c0_69] : memref<1x64x128xf32, #tpu.memory_space<vmem>>, vector<1x1x128xf32>
    %190 = vector.shape_cast %189 : vector<1x1x128xf32> to vector<1x128xf32>
    %191 = vector.extract_strided_slice %7 {offsets = [0, 3840], sizes = [16, 128], strides = [1, 1]} : vector<16x4096xf32> to vector<16x128xf32>
    %192 = vector.broadcast %190 : vector<1x128xf32> to vector<16x128xf32>
    %193 = arith.mulf %191, %192 : vector<16x128xf32>
    %194 = arith.addf %188, %193 : vector<16x128xf32>
    %c0_70 = arith.constant 0 : index
    %c62 = arith.constant 62 : index
    %c0_71 = arith.constant 0 : index
    %195 = vector.load %arg5[%c0_70, %c62, %c0_71] : memref<1x64x128xf32, #tpu.memory_space<vmem>>, vector<1x1x128xf32>
    %196 = vector.shape_cast %195 : vector<1x1x128xf32> to vector<1x128xf32>
    %197 = vector.extract_strided_slice %7 {offsets = [0, 3968], sizes = [16, 128], strides = [1, 1]} : vector<16x4096xf32> to vector<16x128xf32>
    %198 = vector.broadcast %196 : vector<1x128xf32> to vector<16x128xf32>
    %199 = arith.mulf %197, %198 : vector<16x128xf32>
    %200 = arith.addf %194, %199 : vector<16x128xf32>
    %c0_72 = arith.constant 0 : index
    %c0_73 = arith.constant 0 : index
    %c0_74 = arith.constant 0 : index
    %201 = vector.load %arg6[%c0_72, %c0_73, %c0_74] : memref<2x16x128xf32, #tpu.memory_space<vmem>>, vector<1x16x128xf32>
    %202 = vector.shape_cast %201 : vector<1x16x128xf32> to vector<16x128xf32>
    %203 = vector.shape_cast %200 : vector<16x128xf32> to vector<1x16x128xf32>
    tpu.vector_store %arg6[%c0_72, %c0_73, %c0_74], %203 {strides = array<i32>} : memref<2x16x128xf32, #tpu.memory_space<vmem>>, vector<1x16x128xf32>,
    %cst_75 = arith.constant 0.000000e+00 : f32
    %204 = vector.broadcast %cst_75 : f32 to vector<16x128xf32>
    %c0_76 = arith.constant 0 : index
    %c1 = arith.constant 1 : index
    %c0_77 = arith.constant 0 : index
    %205 = vector.load %arg5[%c0_76, %c1, %c0_77] : memref<1x64x128xf32, #tpu.memory_space<vmem>>, vector<1x1x128xf32>
    %206 = vector.shape_cast %205 : vector<1x1x128xf32> to vector<1x128xf32>
    %207 = vector.extract_strided_slice %7 {offsets = [0, 0], sizes = [16, 128], strides = [1, 1]} : vector<16x4096xf32> to vector<16x128xf32>
    %208 = vector.broadcast %206 : vector<1x128xf32> to vector<16x128xf32>
    %209 = arith.mulf %207, %208 : vector<16x128xf32>
    %210 = arith.addf %204, %209 : vector<16x128xf32>
    %c0_78 = arith.constant 0 : index
    %c3 = arith.constant 3 : index
    %c0_79 = arith.constant 0 : index
    %211 = vector.load %arg5[%c0_78, %c3, %c0_79] : memref<1x64x128xf32, #tpu.memory_space<vmem>>, vector<1x1x128xf32>
    %212 = vector.shape_cast %211 : vector<1x1x128xf32> to vector<1x128xf32>
    %213 = vector.extract_strided_slice %7 {offsets = [0, 128], sizes = [16, 128], strides = [1, 1]} : vector<16x4096xf32> to vector<16x128xf32>
    %214 = vector.broadcast %212 : vector<1x128xf32> to vector<16x128xf32>
    %215 = arith.mulf %213, %214 : vector<16x128xf32>
    %216 = arith.addf %210, %215 : vector<16x128xf32>
    %c0_80 = arith.constant 0 : index
    %c5 = arith.constant 5 : index
    %c0_81 = arith.constant 0 : index
    %217 = vector.load %arg5[%c0_80, %c5, %c0_81] : memref<1x64x128xf32, #tpu.memory_space<vmem>>, vector<1x1x128xf32>
    %218 = vector.shape_cast %217 : vector<1x1x128xf32> to vector<1x128xf32>
    %219 = vector.extract_strided_slice %7 {offsets = [0, 256], sizes = [16, 128], strides = [1, 1]} : vector<16x4096xf32> to vector<16x128xf32>
    %220 = vector.broadcast %218 : vector<1x128xf32> to vector<16x128xf32>
    %221 = arith.mulf %219, %220 : vector<16x128xf32>
    %222 = arith.addf %216, %221 : vector<16x128xf32>
    %c0_82 = arith.constant 0 : index
    %c7 = arith.constant 7 : index
    %c0_83 = arith.constant 0 : index
    %223 = vector.load %arg5[%c0_82, %c7, %c0_83] : memref<1x64x128xf32, #tpu.memory_space<vmem>>, vector<1x1x128xf32>
    %224 = vector.shape_cast %223 : vector<1x1x128xf32> to vector<1x128xf32>
    %225 = vector.extract_strided_slice %7 {offsets = [0, 384], sizes = [16, 128], strides = [1, 1]} : vector<16x4096xf32> to vector<16x128xf32>
    %226 = vector.broadcast %224 : vector<1x128xf32> to vector<16x128xf32>
    %227 = arith.mulf %225, %226 : vector<16x128xf32>
    %228 = arith.addf %222, %227 : vector<16x128xf32>
    %c0_84 = arith.constant 0 : index
    %c9 = arith.constant 9 : index
    %c0_85 = arith.constant 0 : index
    %229 = vector.load %arg5[%c0_84, %c9, %c0_85] : memref<1x64x128xf32, #tpu.memory_space<vmem>>, vector<1x1x128xf32>
    %230 = vector.shape_cast %229 : vector<1x1x128xf32> to vector<1x128xf32>
    %231 = vector.extract_strided_slice %7 {offsets = [0, 512], sizes = [16, 128], strides = [1, 1]} : vector<16x4096xf32> to vector<16x128xf32>
    %232 = vector.broadcast %230 : vector<1x128xf32> to vector<16x128xf32>
    %233 = arith.mulf %231, %232 : vector<16x128xf32>
    %234 = arith.addf %228, %233 : vector<16x128xf32>
    %c0_86 = arith.constant 0 : index
    %c11 = arith.constant 11 : index
    %c0_87 = arith.constant 0 : index
    %235 = vector.load %arg5[%c0_86, %c11, %c0_87] : memref<1x64x128xf32, #tpu.memory_space<vmem>>, vector<1x1x128xf32>
    %236 = vector.shape_cast %235 : vector<1x1x128xf32> to vector<1x128xf32>
    %237 = vector.extract_strided_slice %7 {offsets = [0, 640], sizes = [16, 128], strides = [1, 1]} : vector<16x4096xf32> to vector<16x128xf32>
    %238 = vector.broadcast %236 : vector<1x128xf32> to vector<16x128xf32>
    %239 = arith.mulf %237, %238 : vector<16x128xf32>
    %240 = arith.addf %234, %239 : vector<16x128xf32>
    %c0_88 = arith.constant 0 : index
    %c13 = arith.constant 13 : index
    %c0_89 = arith.constant 0 : index
    %241 = vector.load %arg5[%c0_88, %c13, %c0_89] : memref<1x64x128xf32, #tpu.memory_space<vmem>>, vector<1x1x128xf32>
    %242 = vector.shape_cast %241 : vector<1x1x128xf32> to vector<1x128xf32>
    %243 = vector.extract_strided_slice %7 {offsets = [0, 768], sizes = [16, 128], strides = [1, 1]} : vector<16x4096xf32> to vector<16x128xf32>
    %244 = vector.broadcast %242 : vector<1x128xf32> to vector<16x128xf32>
    %245 = arith.mulf %243, %244 : vector<16x128xf32>
    %246 = arith.addf %240, %245 : vector<16x128xf32>
    %c0_90 = arith.constant 0 : index
    %c15 = arith.constant 15 : index
    %c0_91 = arith.constant 0 : index
    %247 = vector.load %arg5[%c0_90, %c15, %c0_91] : memref<1x64x128xf32, #tpu.memory_space<vmem>>, vector<1x1x128xf32>
    %248 = vector.shape_cast %247 : vector<1x1x128xf32> to vector<1x128xf32>
    %249 = vector.extract_strided_slice %7 {offsets = [0, 896], sizes = [16, 128], strides = [1, 1]} : vector<16x4096xf32> to vector<16x128xf32>
    %250 = vector.broadcast %248 : vector<1x128xf32> to vector<16x128xf32>
    %251 = arith.mulf %249, %250 : vector<16x128xf32>
    %252 = arith.addf %246, %251 : vector<16x128xf32>
    %c0_92 = arith.constant 0 : index
    %c17 = arith.constant 17 : index
    %c0_93 = arith.constant 0 : index
    %253 = vector.load %arg5[%c0_92, %c17, %c0_93] : memref<1x64x128xf32, #tpu.memory_space<vmem>>, vector<1x1x128xf32>
    %254 = vector.shape_cast %253 : vector<1x1x128xf32> to vector<1x128xf32>
    %255 = vector.extract_strided_slice %7 {offsets = [0, 1024], sizes = [16, 128], strides = [1, 1]} : vector<16x4096xf32> to vector<16x128xf32>
    %256 = vector.broadcast %254 : vector<1x128xf32> to vector<16x128xf32>
    %257 = arith.mulf %255, %256 : vector<16x128xf32>
    %258 = arith.addf %252, %257 : vector<16x128xf32>
    %c0_94 = arith.constant 0 : index
    %c19 = arith.constant 19 : index
    %c0_95 = arith.constant 0 : index
    %259 = vector.load %arg5[%c0_94, %c19, %c0_95] : memref<1x64x128xf32, #tpu.memory_space<vmem>>, vector<1x1x128xf32>
    %260 = vector.shape_cast %259 : vector<1x1x128xf32> to vector<1x128xf32>
    %261 = vector.extract_strided_slice %7 {offsets = [0, 1152], sizes = [16, 128], strides = [1, 1]} : vector<16x4096xf32> to vector<16x128xf32>
    %262 = vector.broadcast %260 : vector<1x128xf32> to vector<16x128xf32>
    %263 = arith.mulf %261, %262 : vector<16x128xf32>
    %264 = arith.addf %258, %263 : vector<16x128xf32>
    %c0_96 = arith.constant 0 : index
    %c21 = arith.constant 21 : index
    %c0_97 = arith.constant 0 : index
    %265 = vector.load %arg5[%c0_96, %c21, %c0_97] : memref<1x64x128xf32, #tpu.memory_space<vmem>>, vector<1x1x128xf32>
    %266 = vector.shape_cast %265 : vector<1x1x128xf32> to vector<1x128xf32>
    %267 = vector.extract_strided_slice %7 {offsets = [0, 1280], sizes = [16, 128], strides = [1, 1]} : vector<16x4096xf32> to vector<16x128xf32>
    %268 = vector.broadcast %266 : vector<1x128xf32> to vector<16x128xf32>
    %269 = arith.mulf %267, %268 : vector<16x128xf32>
    %270 = arith.addf %264, %269 : vector<16x128xf32>
    %c0_98 = arith.constant 0 : index
    %c23 = arith.constant 23 : index
    %c0_99 = arith.constant 0 : index
    %271 = vector.load %arg5[%c0_98, %c23, %c0_99] : memref<1x64x128xf32, #tpu.memory_space<vmem>>, vector<1x1x128xf32>
    %272 = vector.shape_cast %271 : vector<1x1x128xf32> to vector<1x128xf32>
    %273 = vector.extract_strided_slice %7 {offsets = [0, 1408], sizes = [16, 128], strides = [1, 1]} : vector<16x4096xf32> to vector<16x128xf32>
    %274 = vector.broadcast %272 : vector<1x128xf32> to vector<16x128xf32>
    %275 = arith.mulf %273, %274 : vector<16x128xf32>
    %276 = arith.addf %270, %275 : vector<16x128xf32>
    %c0_100 = arith.constant 0 : index
    %c25 = arith.constant 25 : index
    %c0_101 = arith.constant 0 : index
    %277 = vector.load %arg5[%c0_100, %c25, %c0_101] : memref<1x64x128xf32, #tpu.memory_space<vmem>>, vector<1x1x128xf32>
    %278 = vector.shape_cast %277 : vector<1x1x128xf32> to vector<1x128xf32>
    %279 = vector.extract_strided_slice %7 {offsets = [0, 1536], sizes = [16, 128], strides = [1, 1]} : vector<16x4096xf32> to vector<16x128xf32>
    %280 = vector.broadcast %278 : vector<1x128xf32> to vector<16x128xf32>
    %281 = arith.mulf %279, %280 : vector<16x128xf32>
    %282 = arith.addf %276, %281 : vector<16x128xf32>
    %c0_102 = arith.constant 0 : index
    %c27 = arith.constant 27 : index
    %c0_103 = arith.constant 0 : index
    %283 = vector.load %arg5[%c0_102, %c27, %c0_103] : memref<1x64x128xf32, #tpu.memory_space<vmem>>, vector<1x1x128xf32>
    %284 = vector.shape_cast %283 : vector<1x1x128xf32> to vector<1x128xf32>
    %285 = vector.extract_strided_slice %7 {offsets = [0, 1664], sizes = [16, 128], strides = [1, 1]} : vector<16x4096xf32> to vector<16x128xf32>
    %286 = vector.broadcast %284 : vector<1x128xf32> to vector<16x128xf32>
    %287 = arith.mulf %285, %286 : vector<16x128xf32>
    %288 = arith.addf %282, %287 : vector<16x128xf32>
    %c0_104 = arith.constant 0 : index
    %c29 = arith.constant 29 : index
    %c0_105 = arith.constant 0 : index
    %289 = vector.load %arg5[%c0_104, %c29, %c0_105] : memref<1x64x128xf32, #tpu.memory_space<vmem>>, vector<1x1x128xf32>
    %290 = vector.shape_cast %289 : vector<1x1x128xf32> to vector<1x128xf32>
    %291 = vector.extract_strided_slice %7 {offsets = [0, 1792], sizes = [16, 128], strides = [1, 1]} : vector<16x4096xf32> to vector<16x128xf32>
    %292 = vector.broadcast %290 : vector<1x128xf32> to vector<16x128xf32>
    %293 = arith.mulf %291, %292 : vector<16x128xf32>
    %294 = arith.addf %288, %293 : vector<16x128xf32>
    %c0_106 = arith.constant 0 : index
    %c31 = arith.constant 31 : index
    %c0_107 = arith.constant 0 : index
    %295 = vector.load %arg5[%c0_106, %c31, %c0_107] : memref<1x64x128xf32, #tpu.memory_space<vmem>>, vector<1x1x128xf32>
    %296 = vector.shape_cast %295 : vector<1x1x128xf32> to vector<1x128xf32>
    %297 = vector.extract_strided_slice %7 {offsets = [0, 1920], sizes = [16, 128], strides = [1, 1]} : vector<16x4096xf32> to vector<16x128xf32>
    %298 = vector.broadcast %296 : vector<1x128xf32> to vector<16x128xf32>
    %299 = arith.mulf %297, %298 : vector<16x128xf32>
    %300 = arith.addf %294, %299 : vector<16x128xf32>
    %c0_108 = arith.constant 0 : index
    %c33 = arith.constant 33 : index
    %c0_109 = arith.constant 0 : index
    %301 = vector.load %arg5[%c0_108, %c33, %c0_109] : memref<1x64x128xf32, #tpu.memory_space<vmem>>, vector<1x1x128xf32>
    %302 = vector.shape_cast %301 : vector<1x1x128xf32> to vector<1x128xf32>
    %303 = vector.extract_strided_slice %7 {offsets = [0, 2048], sizes = [16, 128], strides = [1, 1]} : vector<16x4096xf32> to vector<16x128xf32>
    %304 = vector.broadcast %302 : vector<1x128xf32> to vector<16x128xf32>
    %305 = arith.mulf %303, %304 : vector<16x128xf32>
    %306 = arith.addf %300, %305 : vector<16x128xf32>
    %c0_110 = arith.constant 0 : index
    %c35 = arith.constant 35 : index
    %c0_111 = arith.constant 0 : index
    %307 = vector.load %arg5[%c0_110, %c35, %c0_111] : memref<1x64x128xf32, #tpu.memory_space<vmem>>, vector<1x1x128xf32>
    %308 = vector.shape_cast %307 : vector<1x1x128xf32> to vector<1x128xf32>
    %309 = vector.extract_strided_slice %7 {offsets = [0, 2176], sizes = [16, 128], strides = [1, 1]} : vector<16x4096xf32> to vector<16x128xf32>
    %310 = vector.broadcast %308 : vector<1x128xf32> to vector<16x128xf32>
    %311 = arith.mulf %309, %310 : vector<16x128xf32>
    %312 = arith.addf %306, %311 : vector<16x128xf32>
    %c0_112 = arith.constant 0 : index
    %c37 = arith.constant 37 : index
    %c0_113 = arith.constant 0 : index
    %313 = vector.load %arg5[%c0_112, %c37, %c0_113] : memref<1x64x128xf32, #tpu.memory_space<vmem>>, vector<1x1x128xf32>
    %314 = vector.shape_cast %313 : vector<1x1x128xf32> to vector<1x128xf32>
    %315 = vector.extract_strided_slice %7 {offsets = [0, 2304], sizes = [16, 128], strides = [1, 1]} : vector<16x4096xf32> to vector<16x128xf32>
    %316 = vector.broadcast %314 : vector<1x128xf32> to vector<16x128xf32>
    %317 = arith.mulf %315, %316 : vector<16x128xf32>
    %318 = arith.addf %312, %317 : vector<16x128xf32>
    %c0_114 = arith.constant 0 : index
    %c39 = arith.constant 39 : index
    %c0_115 = arith.constant 0 : index
    %319 = vector.load %arg5[%c0_114, %c39, %c0_115] : memref<1x64x128xf32, #tpu.memory_space<vmem>>, vector<1x1x128xf32>
    %320 = vector.shape_cast %319 : vector<1x1x128xf32> to vector<1x128xf32>
    %321 = vector.extract_strided_slice %7 {offsets = [0, 2432], sizes = [16, 128], strides = [1, 1]} : vector<16x4096xf32> to vector<16x128xf32>
    %322 = vector.broadcast %320 : vector<1x128xf32> to vector<16x128xf32>
    %323 = arith.mulf %321, %322 : vector<16x128xf32>
    %324 = arith.addf %318, %323 : vector<16x128xf32>
    %c0_116 = arith.constant 0 : index
    %c41 = arith.constant 41 : index
    %c0_117 = arith.constant 0 : index
    %325 = vector.load %arg5[%c0_116, %c41, %c0_117] : memref<1x64x128xf32, #tpu.memory_space<vmem>>, vector<1x1x128xf32>
    %326 = vector.shape_cast %325 : vector<1x1x128xf32> to vector<1x128xf32>
    %327 = vector.extract_strided_slice %7 {offsets = [0, 2560], sizes = [16, 128], strides = [1, 1]} : vector<16x4096xf32> to vector<16x128xf32>
    %328 = vector.broadcast %326 : vector<1x128xf32> to vector<16x128xf32>
    %329 = arith.mulf %327, %328 : vector<16x128xf32>
    %330 = arith.addf %324, %329 : vector<16x128xf32>
    %c0_118 = arith.constant 0 : index
    %c43 = arith.constant 43 : index
    %c0_119 = arith.constant 0 : index
    %331 = vector.load %arg5[%c0_118, %c43, %c0_119] : memref<1x64x128xf32, #tpu.memory_space<vmem>>, vector<1x1x128xf32>
    %332 = vector.shape_cast %331 : vector<1x1x128xf32> to vector<1x128xf32>
    %333 = vector.extract_strided_slice %7 {offsets = [0, 2688], sizes = [16, 128], strides = [1, 1]} : vector<16x4096xf32> to vector<16x128xf32>
    %334 = vector.broadcast %332 : vector<1x128xf32> to vector<16x128xf32>
    %335 = arith.mulf %333, %334 : vector<16x128xf32>
    %336 = arith.addf %330, %335 : vector<16x128xf32>
    %c0_120 = arith.constant 0 : index
    %c45 = arith.constant 45 : index
    %c0_121 = arith.constant 0 : index
    %337 = vector.load %arg5[%c0_120, %c45, %c0_121] : memref<1x64x128xf32, #tpu.memory_space<vmem>>, vector<1x1x128xf32>
    %338 = vector.shape_cast %337 : vector<1x1x128xf32> to vector<1x128xf32>
    %339 = vector.extract_strided_slice %7 {offsets = [0, 2816], sizes = [16, 128], strides = [1, 1]} : vector<16x4096xf32> to vector<16x128xf32>
    %340 = vector.broadcast %338 : vector<1x128xf32> to vector<16x128xf32>
    %341 = arith.mulf %339, %340 : vector<16x128xf32>
    %342 = arith.addf %336, %341 : vector<16x128xf32>
    %c0_122 = arith.constant 0 : index
    %c47 = arith.constant 47 : index
    %c0_123 = arith.constant 0 : index
    %343 = vector.load %arg5[%c0_122, %c47, %c0_123] : memref<1x64x128xf32, #tpu.memory_space<vmem>>, vector<1x1x128xf32>
    %344 = vector.shape_cast %343 : vector<1x1x128xf32> to vector<1x128xf32>
    %345 = vector.extract_strided_slice %7 {offsets = [0, 2944], sizes = [16, 128], strides = [1, 1]} : vector<16x4096xf32> to vector<16x128xf32>
    %346 = vector.broadcast %344 : vector<1x128xf32> to vector<16x128xf32>
    %347 = arith.mulf %345, %346 : vector<16x128xf32>
    %348 = arith.addf %342, %347 : vector<16x128xf32>
    %c0_124 = arith.constant 0 : index
    %c49 = arith.constant 49 : index
    %c0_125 = arith.constant 0 : index
    %349 = vector.load %arg5[%c0_124, %c49, %c0_125] : memref<1x64x128xf32, #tpu.memory_space<vmem>>, vector<1x1x128xf32>
    %350 = vector.shape_cast %349 : vector<1x1x128xf32> to vector<1x128xf32>
    %351 = vector.extract_strided_slice %7 {offsets = [0, 3072], sizes = [16, 128], strides = [1, 1]} : vector<16x4096xf32> to vector<16x128xf32>
    %352 = vector.broadcast %350 : vector<1x128xf32> to vector<16x128xf32>
    %353 = arith.mulf %351, %352 : vector<16x128xf32>
    %354 = arith.addf %348, %353 : vector<16x128xf32>
    %c0_126 = arith.constant 0 : index
    %c51 = arith.constant 51 : index
    %c0_127 = arith.constant 0 : index
    %355 = vector.load %arg5[%c0_126, %c51, %c0_127] : memref<1x64x128xf32, #tpu.memory_space<vmem>>, vector<1x1x128xf32>
    %356 = vector.shape_cast %355 : vector<1x1x128xf32> to vector<1x128xf32>
    %357 = vector.extract_strided_slice %7 {offsets = [0, 3200], sizes = [16, 128], strides = [1, 1]} : vector<16x4096xf32> to vector<16x128xf32>
    %358 = vector.broadcast %356 : vector<1x128xf32> to vector<16x128xf32>
    %359 = arith.mulf %357, %358 : vector<16x128xf32>
    %360 = arith.addf %354, %359 : vector<16x128xf32>
    %c0_128 = arith.constant 0 : index
    %c53 = arith.constant 53 : index
    %c0_129 = arith.constant 0 : index
    %361 = vector.load %arg5[%c0_128, %c53, %c0_129] : memref<1x64x128xf32, #tpu.memory_space<vmem>>, vector<1x1x128xf32>
    %362 = vector.shape_cast %361 : vector<1x1x128xf32> to vector<1x128xf32>
    %363 = vector.extract_strided_slice %7 {offsets = [0, 3328], sizes = [16, 128], strides = [1, 1]} : vector<16x4096xf32> to vector<16x128xf32>
    %364 = vector.broadcast %362 : vector<1x128xf32> to vector<16x128xf32>
    %365 = arith.mulf %363, %364 : vector<16x128xf32>
    %366 = arith.addf %360, %365 : vector<16x128xf32>
    %c0_130 = arith.constant 0 : index
    %c55 = arith.constant 55 : index
    %c0_131 = arith.constant 0 : index
    %367 = vector.load %arg5[%c0_130, %c55, %c0_131] : memref<1x64x128xf32, #tpu.memory_space<vmem>>, vector<1x1x128xf32>
    %368 = vector.shape_cast %367 : vector<1x1x128xf32> to vector<1x128xf32>
    %369 = vector.extract_strided_slice %7 {offsets = [0, 3456], sizes = [16, 128], strides = [1, 1]} : vector<16x4096xf32> to vector<16x128xf32>
    %370 = vector.broadcast %368 : vector<1x128xf32> to vector<16x128xf32>
    %371 = arith.mulf %369, %370 : vector<16x128xf32>
    %372 = arith.addf %366, %371 : vector<16x128xf32>
    %c0_132 = arith.constant 0 : index
    %c57 = arith.constant 57 : index
    %c0_133 = arith.constant 0 : index
    %373 = vector.load %arg5[%c0_132, %c57, %c0_133] : memref<1x64x128xf32, #tpu.memory_space<vmem>>, vector<1x1x128xf32>
    %374 = vector.shape_cast %373 : vector<1x1x128xf32> to vector<1x128xf32>
    %375 = vector.extract_strided_slice %7 {offsets = [0, 3584], sizes = [16, 128], strides = [1, 1]} : vector<16x4096xf32> to vector<16x128xf32>
    %376 = vector.broadcast %374 : vector<1x128xf32> to vector<16x128xf32>
    %377 = arith.mulf %375, %376 : vector<16x128xf32>
    %378 = arith.addf %372, %377 : vector<16x128xf32>
    %c0_134 = arith.constant 0 : index
    %c59 = arith.constant 59 : index
    %c0_135 = arith.constant 0 : index
    %379 = vector.load %arg5[%c0_134, %c59, %c0_135] : memref<1x64x128xf32, #tpu.memory_space<vmem>>, vector<1x1x128xf32>
    %380 = vector.shape_cast %379 : vector<1x1x128xf32> to vector<1x128xf32>
    %381 = vector.extract_strided_slice %7 {offsets = [0, 3712], sizes = [16, 128], strides = [1, 1]} : vector<16x4096xf32> to vector<16x128xf32>
    %382 = vector.broadcast %380 : vector<1x128xf32> to vector<16x128xf32>
    %383 = arith.mulf %381, %382 : vector<16x128xf32>
    %384 = arith.addf %378, %383 : vector<16x128xf32>
    %c0_136 = arith.constant 0 : index
    %c61 = arith.constant 61 : index
    %c0_137 = arith.constant 0 : index
    %385 = vector.load %arg5[%c0_136, %c61, %c0_137] : memref<1x64x128xf32, #tpu.memory_space<vmem>>, vector<1x1x128xf32>
    %386 = vector.shape_cast %385 : vector<1x1x128xf32> to vector<1x128xf32>
    %387 = vector.extract_strided_slice %7 {offsets = [0, 3840], sizes = [16, 128], strides = [1, 1]} : vector<16x4096xf32> to vector<16x128xf32>
    %388 = vector.broadcast %386 : vector<1x128xf32> to vector<16x128xf32>
    %389 = arith.mulf %387, %388 : vector<16x128xf32>
    %390 = arith.addf %384, %389 : vector<16x128xf32>
    %c0_138 = arith.constant 0 : index
    %c63 = arith.constant 63 : index
    %c0_139 = arith.constant 0 : index
    %391 = vector.load %arg5[%c0_138, %c63, %c0_139] : memref<1x64x128xf32, #tpu.memory_space<vmem>>, vector<1x1x128xf32>
    %392 = vector.shape_cast %391 : vector<1x1x128xf32> to vector<1x128xf32>
    %393 = vector.extract_strided_slice %7 {offsets = [0, 3968], sizes = [16, 128], strides = [1, 1]} : vector<16x4096xf32> to vector<16x128xf32>
    %394 = vector.broadcast %392 : vector<1x128xf32> to vector<16x128xf32>
    %395 = arith.mulf %393, %394 : vector<16x128xf32>
    %396 = arith.addf %390, %395 : vector<16x128xf32>
    %c1_140 = arith.constant 1 : index
    %c0_141 = arith.constant 0 : index
    %c0_142 = arith.constant 0 : index
    %397 = vector.load %arg6[%c1_140, %c0_141, %c0_142] : memref<2x16x128xf32, #tpu.memory_space<vmem>>, vector<1x16x128xf32>
    %398 = vector.shape_cast %397 : vector<1x16x128xf32> to vector<16x128xf32>
    %399 = vector.shape_cast %396 : vector<16x128xf32> to vector<1x16x128xf32>
    tpu.vector_store %arg6[%c1_140, %c0_141, %c0_142], %399 {strides = array<i32>} : memref<2x16x128xf32, #tpu.memory_space<vmem>>, vector<1x16x128xf32>,
    return
  }
  func.func @transform_0(%arg0: i32, %arg1: i32) -> (i32, i32) {
    %c0_i32 = arith.constant 0 : i32
    %c0_i32_0 = arith.constant 0 : i32
    return %arg1, %c0_i32 : i32, i32
  }
  func.func @transform_1(%arg0: i32, %arg1: i32) -> (i32, i32) {
    %c0_i32 = arith.constant 0 : i32
    %c0_i32_0 = arith.constant 0 : i32
    return %c0_i32, %arg0 : i32, i32
  }
  func.func @transform_2(%arg0: i32, %arg1: i32) -> (i32, i32) {
    %c0_i32 = arith.constant 0 : i32
    %c0_i32_0 = arith.constant 0 : i32
    return %c0_i32, %arg0 : i32, i32
  }
  func.func @transform_3(%arg0: i32, %arg1: i32) -> (i32, i32, i32) {
    %c0_i32 = arith.constant 0 : i32
    %c0_i32_0 = arith.constant 0 : i32
    %c0_i32_1 = arith.constant 0 : i32
    return %arg0, %c0_i32, %c0_i32_0 : i32, i32, i32
  }
  func.func @transform_4(%arg0: i32, %arg1: i32) -> (i32, i32, i32) {
    %c0_i32 = arith.constant 0 : i32
    %c0_i32_0 = arith.constant 0 : i32
    return %c0_i32, %arg1, %arg0 : i32, i32, i32
  }
}

</mosaic_0001>

<llo_original>
// kernel: tpu_custom_call.1
$region0: #{tpu_custom_call.1}
  #allocation0 [shape = 'u32[]', space=smem, size = 0x4, offset = 0x4, fixed_abs, tag = 'smem constant byte address 0x4 - core index']
  #allocation1 [shape = 'u32[144,128]{1,0:T(1,128)}', space=vmem, size = 0x12000, scoped, tag = 'internal scratch']
  %s0 = inlined_call_operand.hbm [shape: bf16[16,32], index: 0, kind: input, shape index: {}]
  %s1 = inlined_call_operand.hbm [shape: bf16[32,8192], index: 1, kind: input, shape index: {}]
  %s2 = inlined_call_operand.hbm [shape: f32[1,8192], index: 2, kind: input, shape index: {}]
  %s3 = inlined_call_operand.hbm [shape: f32[2,64,128], index: 3, kind: input, shape index: {}]
  %s4 = inlined_call_operand.hbm [shape: f32[2,16,256], index: 4, kind: output, shape index: {}]
  %s5 = sld [smem:[#allocation0]]
  $region65: #{tpu_custom_call.1} parent=0
    _
  %s7 = ssub.s32 1, %s5
  %s8 = scalar_select 0, %s7, %s5
  $region1: #{tpu_custom_call.1} parent=0
    #allocation2 [shape = 'u8[4096]{0}', space=vmem, size = 0x1000, scoped, tag = 'input window, operand 0, single buffered']
    #allocation3 [shape = 's32[2]{0}', space=sflag, size = 0x8, scoped, tag = 'scoped memory for tpu_custom_call.1']
    #allocation4 [shape = 's32[2]{0}', space=sflag, size = 0x8, scoped, tag = 'scoped memory for tpu_custom_call.1']
    #allocation5 [shape = 'u8[524288]{0}', space=vmem, size = 0x80000, scoped, tag = 'input window, operand 1']
    #allocation6 [shape = 's32[2]{0}', space=sflag, size = 0x8, scoped, tag = 'scoped memory for tpu_custom_call.1']
    #allocation7 [shape = 'u8[32768]{0}', space=vmem, size = 0x8000, scoped, tag = 'input window, operand 2']
    #allocation8 [shape = 'u8[65536]{0}', space=vmem, size = 0x10000, scoped, tag = 'input window, operand 3']
    #allocation9 [shape = 's32[2]{0}', space=sflag, size = 0x8, scoped, tag = 'scoped memory for tpu_custom_call.1']
    #allocation10 [shape = 'u8[32768]{0}', space=vmem, size = 0x8000, scoped, tag = 'output window, operand 0']
    %9 = vsyncpa [#allocation3], 0
    %10 = vsyncpa [#allocation6], 0
    %s11 = scalar_lea.sflag [#allocation6], 1
    %12 = vsyncpa %s11, 0
    %13 = vsyncpa [#allocation9], 0
    %s14 = scalar_lea.sflag [#allocation9], 1
    %15 = vsyncpa %s14, 0
    %16 = vsyncpa [#allocation4], 0
    %s17 = scalar_lea.sflag [#allocation4], 1
    %18 = vsyncpa %s17, 0
    loop: start=0, step=1, limit=4
    $region2: #{tpu_custom_call.1} parent=1 // loop_pre_header
      _
    $region3: #{tpu_custom_call.1} parent=1 // loop_header
      %s20 = sphi 0, %s24
      %p21 = scmp.ge.s32.totalorder %s20, 4
      %s27 = sphi 0, %s39
      %s28 = sphi 0, %s35
      %s29 = sphi 0, %s27
      %s30 = sphi 0, %s28
      %s31 = sphi 0, %s29
      %s32 = sphi 0, %s30
      %s42 = sphi 0, %s44
      %s45 = sphi 0, %s42
      %s46 = sphi 0, %s45
      %s62 = sphi 0, %s46
      %s68 = sphi 0, %s70
      %s71 = sphi 0, %s68
      %s72 = sphi 0, %s71
      %s88 = sphi 0, %s72
      %s94 = sphi 0, %s96
      %s97 = sphi 0, %s94
      %s98 = sphi 0, %s97
      %s114 = sphi 0, %s98
      %s120 = sphi 0, %s122
      %s123 = sphi 0, %s120
      %s124 = sphi 0, %s123
      %s140 = sphi 0, %s124
      %s148 = sphi 0, %s150
      %s151 = sphi 0, %s148
      %s152 = sphi 0, %s151
      %s168 = sphi 0, %s152
    $region4: #{tpu_custom_call.1} parent=1 // loop_header_branch
      %23 = sbr.rel (%p21) target = $region8
    $region5: #{tpu_custom_call.1} parent=1 // loop_body
      %s25 = ssub.s32 %s20, 1
      %s26 = ssub.s32 %s20, 2
      %s33 = sadd.s32 1, %s28
      %p34 = scmp.ge.s32.totalorder %s33, 1
      %s35 = scalar_select %p34, 0, %s33
      %s36 = sadd.s32 1, %s27
      %s37 = scalar_select %p34, %s36, %s27
      %p38 = scmp.ge.s32.totalorder %s37, 2
      %s39 = scalar_select %p38, 0, %s37
      %s40 = ssub.s32 %s28, %s35
      %p41 = scmp.eq.s32.totalorder %s40, 0
      %s43 = sadd.s32 %s42, 1
      %s44 = scalar_select %p41, %s42, %s43
      %p47 = pneg %p41
      %p48 = scmp.eq.s32.totalorder %s20, 1
      %p49 = por %p47, %p48
      %p50 = scmp.ne.s32.totalorder %s42, %s45
      %p51 = scmp.eq.s32.totalorder %s20, 0
      %p52 = por %p50, %p51
      %p53 = scmp.ne.s32.totalorder %s42, %s45
      %p54 = scmp.eq.s32.totalorder %s25, 1
      %p55 = por %p53, %p54
      %p56 = scmp.ne.s32.totalorder %s45, %s46
      %p57 = scmp.eq.s32.totalorder %s25, 0
      %p58 = por %p56, %p57
      %p59 = scmp.ne.s32.totalorder %s45, %s46
      %p60 = scmp.eq.s32.totalorder %s26, 1
      %p61 = por %p59, %p60
      %p63 = scmp.ne.s32.totalorder %s46, %s62
      %p64 = scmp.eq.s32.totalorder %s26, 0
      %p65 = por %p63, %p64
      %s66 = ssub.s32 %s27, %s39
      %p67 = scmp.eq.s32.totalorder %s66, 0
      %s69 = sadd.s32 %s68, 1
      %s70 = scalar_select %p67, %s68, %s69
      %p73 = pneg %p67
      %p74 = scmp.eq.s32.totalorder %s20, 1
      %p75 = por %p73, %p74
      %p76 = scmp.ne.s32.totalorder %s68, %s71
      %p77 = scmp.eq.s32.totalorder %s20, 0
      %p78 = por %p76, %p77
      %p79 = scmp.ne.s32.totalorder %s68, %s71
      %p80 = scmp.eq.s32.totalorder %s25, 1
      %p81 = por %p79, %p80
      %p82 = scmp.ne.s32.totalorder %s71, %s72
      %p83 = scmp.eq.s32.totalorder %s25, 0
      %p84 = por %p82, %p83
      %p85 = scmp.ne.s32.totalorder %s71, %s72
      %p86 = scmp.eq.s32.totalorder %s26, 1
      %p87 = por %p85, %p86
      %p89 = scmp.ne.s32.totalorder %s72, %s88
      %p90 = scmp.eq.s32.totalorder %s26, 0
      %p91 = por %p89, %p90
      %s92 = ssub.s32 %s27, %s39
      %p93 = scmp.eq.s32.totalorder %s92, 0
      %s95 = sadd.s32 %s94, 1
      %s96 = scalar_select %p93, %s94, %s95
      %p99 = pneg %p93
      %p100 = scmp.eq.s32.totalorder %s20, 1
      %p101 = por %p99, %p100
      %p102 = scmp.ne.s32.totalorder %s94, %s97
      %p103 = scmp.eq.s32.totalorder %s20, 0
      %p104 = por %p102, %p103
      %p105 = scmp.ne.s32.totalorder %s94, %s97
      %p106 = scmp.eq.s32.totalorder %s25, 1
      %p107 = por %p105, %p106
      %p108 = scmp.ne.s32.totalorder %s97, %s98
      %p109 = scmp.eq.s32.totalorder %s25, 0
      %p110 = por %p108, %p109
      %p111 = scmp.ne.s32.totalorder %s97, %s98
      %p112 = scmp.eq.s32.totalorder %s26, 1
      %p113 = por %p111, %p112
      %p115 = scmp.ne.s32.totalorder %s98, %s114
      %p116 = scmp.eq.s32.totalorder %s26, 0
      %p117 = por %p115, %p116
      %s118 = ssub.s32 %s27, %s39
      %p119 = scmp.eq.s32.totalorder %s118, 0
      %s121 = sadd.s32 %s120, 1
      %s122 = scalar_select %p119, %s120, %s121
      %p125 = pneg %p119
      %p126 = scmp.eq.s32.totalorder %s20, 1
      %p127 = por %p125, %p126
      %p128 = scmp.ne.s32.totalorder %s120, %s123
      %p129 = scmp.eq.s32.totalorder %s20, 0
      %p130 = por %p128, %p129
      %p131 = scmp.ne.s32.totalorder %s120, %s123
      %p132 = scmp.eq.s32.totalorder %s25, 1
      %p133 = por %p131, %p132
      %p134 = scmp.ne.s32.totalorder %s123, %s124
      %p135 = scmp.eq.s32.totalorder %s25, 0
      %p136 = por %p134, %p135
      %p137 = scmp.ne.s32.totalorder %s123, %s124
      %p138 = scmp.eq.s32.totalorder %s26, 1
      %p139 = por %p137, %p138
      %p141 = scmp.ne.s32.totalorder %s124, %s140
      %p142 = scmp.eq.s32.totalorder %s26, 0
      %p143 = por %p141, %p142
      %s144 = ssub.s32 %s28, %s35
      %s145 = ssub.s32 %s27, %s39
      %s146 = sor.u32 %s144, %s145
      %p147 = scmp.eq.s32.totalorder %s146, 0
      %s149 = sadd.s32 %s148, 1
      %s150 = scalar_select %p147, %s148, %s149
      %p153 = pneg %p147
      %p154 = scmp.eq.s32.totalorder %s20, 1
      %p155 = por %p153, %p154
      %p156 = scmp.ne.s32.totalorder %s148, %s151
      %p157 = scmp.eq.s32.totalorder %s20, 0
      %p158 = por %p156, %p157
      %p159 = scmp.ne.s32.totalorder %s148, %s151
      %p160 = scmp.eq.s32.totalorder %s25, 1
      %p161 = por %p159, %p160
      %p162 = scmp.ne.s32.totalorder %s151, %s152
      %p163 = scmp.eq.s32.totalorder %s25, 0
      %p164 = por %p162, %p163
      %p165 = scmp.ne.s32.totalorder %s151, %s152
      %p166 = scmp.eq.s32.totalorder %s26, 1
      %p167 = por %p165, %p166
      %p169 = scmp.ne.s32.totalorder %s152, %s168
      %p170 = scmp.eq.s32.totalorder %s26, 0
      %p171 = por %p169, %p170
      %p172 = scmp.le.s32.totalorder 1, %s20
      %p173 = scmp.lt.s32.totalorder %s20, 3
      %p174 = pnand %p172, %p173
      %p175 = pneg %p174
      // Predicated region
      $region9: #{tpu_custom_call.1} parent=5 // pred_check
        _
      $region10: #{tpu_custom_call.1} parent=5 // pred_check_branch
        %177 = sbr.rel (%p174) target = $region12
      $region11: #{tpu_custom_call.1} parent=5 // pred_region
        %s178 = ssub.s32 %s20, 1
        // Predicated region
        $region13: #{tpu_custom_call.1} parent=11 // pred_check
          %p179 = pneg %p58
        $region14: #{tpu_custom_call.1} parent=11 // pred_check_branch
          %181 = sbr.rel (%p179) target = $region16
        $region15: #{tpu_custom_call.1} parent=11 // pred_region
          %s182 = smul.u32 2, %s30
          %s184 = ssub.s32 128, 128
          %185 = vsyncadd [#allocation3], %s184
          %s186 = smul.addr %s182, 64
          %s187 = scalar_lea.hbm %s0, %s186
          %s188 = sshll.u32 [#allocation2], 4
          %s189 = int_to_ptr.vmem [resolvable:$true] %s188
          %194 = dma.hbm_to_vmem [thread:$0]  %s187, 128, %s189, [#allocation3], 64, 64, 4
        $region16: #{tpu_custom_call.1} parent=11 // pred_fallthru
          _
      $region12: #{tpu_custom_call.1} parent=5 // pred_fallthru
        _
      %p195 = scmp.lt.s32.totalorder %s20, 2
      // Predicated region
      $region17: #{tpu_custom_call.1} parent=5 // pred_check
        %p196 = pneg %p195
      $region18: #{tpu_custom_call.1} parent=5 // pred_check_branch
        %198 = sbr.rel (%p196) target = $region20
      $region19: #{tpu_custom_call.1} parent=5 // pred_region
        // Predicated region
        $region21: #{tpu_custom_call.1} parent=19 // pred_check
          %p199 = pneg %p78
        $region22: #{tpu_custom_call.1} parent=19 // pred_check_branch
          %201 = sbr.rel (%p199) target = $region24
        $region23: #{tpu_custom_call.1} parent=19 // pred_region
          %s202 = sand.u32 %s20, 1
          %s203 = scalar_lea.sflag [#allocation6], %s202
          %s204 = sand.u32 %s68, 1
          %s205 = smul.addr %s204, 512
          %s206 = scalar_lea.vmem [#allocation5], %s205
          %s207 = smul.u32 32, %s27
          %s209 = ssub.s32 8192, 8192
          %210 = vsyncadd %s203, %s209
          %s211 = smul.addr %s207, 64
          %s212 = scalar_lea.hbm %s1, %s211
          %s213 = sshll.u32 %s206, 4
          %s214 = int_to_ptr.vmem [resolvable:$true] %s213
          %219 = dma.hbm_to_vmem [thread:$0]  %s212, 8192, %s214, %s203, 4096, 2048, 128
        $region24: #{tpu_custom_call.1} parent=19 // pred_fallthru
          _
        // Predicated region
        $region25: #{tpu_custom_call.1} parent=19 // pred_check
          %p220 = pneg %p104
        $region26: #{tpu_custom_call.1} parent=19 // pred_check_branch
          %222 = sbr.rel (%p220) target = $region28
        $region27: #{tpu_custom_call.1} parent=19 // pred_region
          %s223 = sand.u32 %s20, 1
          %s224 = scalar_lea.sflag [#allocation6], %s223
          %s225 = sand.u32 %s94, 1
          %s226 = smul.addr %s225, 32
          %s227 = scalar_lea.vmem [#allocation7], %s226
          %s228 = smul.u32 32, %s27
          %s230 = ssub.s32 512, 512
          %231 = vsyncadd %s224, %s230
          %s232 = smul.addr %s228, 16
          %s233 = scalar_lea.hbm %s2, %s232
          %s235 = sshll.u32 %s227, 4
          %s236 = int_to_ptr.vmem [resolvable:$true] %s235
          %238 = dma.hbm_to_vmem [thread:$0]  %s233, 512, %s236, %s224
        $region28: #{tpu_custom_call.1} parent=19 // pred_fallthru
          _
        // Predicated region
        $region29: #{tpu_custom_call.1} parent=19 // pred_check
          %p239 = pneg %p130
        $region30: #{tpu_custom_call.1} parent=19 // pred_check_branch
          %241 = sbr.rel (%p239) target = $region32
        $region31: #{tpu_custom_call.1} parent=19 // pred_region
          %s242 = sand.u32 %s120, 1
          %s243 = scalar_lea.sflag [#allocation9], %s242
          %s244 = sand.u32 %s120, 1
          %s245 = smul.addr %s244, 64
          %s246 = scalar_lea.vmem [#allocation8], %s245
          %s248 = ssub.s32 1024, 1024
          %249 = vsyncadd %s243, %s248
          %s250 = smul.addr %s27, 8
          %s251 = smul.addr %s250, 128
          %s252 = scalar_lea.hbm %s3, %s251
          %s253 = sshll.u32 %s246, 4
          %s254 = int_to_ptr.vmem [resolvable:$true] %s253
          %259 = dma.hbm_to_vmem [thread:$0]  %s252, 1024, %s254, %s243, 128, 128, 8
        $region32: #{tpu_custom_call.1} parent=19 // pred_fallthru
          _
      $region20: #{tpu_custom_call.1} parent=5 // pred_fallthru
        _
      %p260 = scmp.le.s32.totalorder 1, %s20
      %p261 = scmp.lt.s32.totalorder %s20, 3
      %p262 = pnand %p260, %p261
      %p263 = pneg %p262
      // Predicated region
      $region33: #{tpu_custom_call.1} parent=5 // pred_check
        _
      $region34: #{tpu_custom_call.1} parent=5 // pred_check_branch
        %265 = sbr.rel (%p262) target = $region36
      $region35: #{tpu_custom_call.1} parent=5 // pred_region
        %s266 = ssub.s32 %s20, 1
        // Predicated region
        $region37: #{tpu_custom_call.1} parent=35 // pred_check
          %p267 = pneg %p58
        $region38: #{tpu_custom_call.1} parent=35 // pred_check_branch
          %269 = sbr.rel (%p267) target = $region40
        $region39: #{tpu_custom_call.1} parent=35 // pred_region
          %270 = dma.done [#allocation3], 128
        $region40: #{tpu_custom_call.1} parent=35 // pred_fallthru
          _
        %s271 = sand.u32 %s25, 1
        %s272 = scalar_lea.sflag [#allocation6], %s271
        %s273 = sand.u32 %s71, 1
        %s274 = smul.addr %s273, 512
        %s275 = scalar_lea.vmem [#allocation5], %s274
        // Predicated region
        $region41: #{tpu_custom_call.1} parent=35 // pred_check
          %p276 = pneg %p84
        $region42: #{tpu_custom_call.1} parent=35 // pred_check_branch
          %278 = sbr.rel (%p276) target = $region44
        $region43: #{tpu_custom_call.1} parent=35 // pred_region
          %279 = dma.done %s272, 8192
        $region44: #{tpu_custom_call.1} parent=35 // pred_fallthru
          _
        %s280 = sand.u32 %s25, 1
        %s281 = scalar_lea.sflag [#allocation6], %s280
        %s282 = sand.u32 %s97, 1
        %s283 = smul.addr %s282, 32
        %s284 = scalar_lea.vmem [#allocation7], %s283
        // Predicated region
        $region45: #{tpu_custom_call.1} parent=35 // pred_check
          %p285 = pneg %p110
        $region46: #{tpu_custom_call.1} parent=35 // pred_check_branch
          %287 = sbr.rel (%p285) target = $region48
        $region47: #{tpu_custom_call.1} parent=35 // pred_region
          %288 = dma.done %s281, 512
        $region48: #{tpu_custom_call.1} parent=35 // pred_fallthru
          _
        %s289 = sand.u32 %s123, 1
        %s290 = scalar_lea.sflag [#allocation9], %s289
        %s291 = sand.u32 %s123, 1
        %s292 = smul.addr %s291, 64
        %s293 = scalar_lea.vmem [#allocation8], %s292
        // Predicated region
        $region49: #{tpu_custom_call.1} parent=35 // pred_check
          %p294 = pneg %p136
        $region50: #{tpu_custom_call.1} parent=35 // pred_check_branch
          %296 = sbr.rel (%p294) target = $region52
        $region51: #{tpu_custom_call.1} parent=35 // pred_region
          %297 = dma.done %s290, 1024
        $region52: #{tpu_custom_call.1} parent=35 // pred_fallthru
          _
        %p298 = pneg %p58
        %p299 = pneg %p55
        %s300 = sand.u32 %s25, 1
        %s301 = scalar_lea.sflag [#allocation6], %s300
        %s302 = sand.u32 %s71, 1
        %s303 = smul.addr %s302, 512
        %s304 = scalar_lea.vmem [#allocation5], %s303
        %p305 = pneg %p84
        %p306 = pneg %p81
        %s307 = sand.u32 %s25, 1
        %s308 = scalar_lea.sflag [#allocation6], %s307
        %s309 = sand.u32 %s97, 1
        %s310 = smul.addr %s309, 32
        %s311 = scalar_lea.vmem [#allocation7], %s310
        %p312 = pneg %p110
        %p313 = pneg %p107
        %s314 = sand.u32 %s123, 1
        %s315 = scalar_lea.sflag [#allocation9], %s314
        %s316 = sand.u32 %s123, 1
        %s317 = smul.addr %s316, 64
        %s318 = scalar_lea.vmem [#allocation8], %s317
        %p319 = pneg %p136
        %p320 = pneg %p133
        %p321 = pneg %p164
        %p322 = pneg %p161
        %s323 = sand.u32 %s151, 1
        %s324 = scalar_lea.sflag [#allocation4], %s323
        %s325 = sand.u32 %s151, 1
        %s326 = smul.addr %s325, 32
        %s327 = scalar_lea.vmem [#allocation10], %s326
        %s328 = smul.u32 2, %s30
        %s329 = smul.u32 32, %s29
        %s330 = smul.u32 32, %s29
        %s331 = smul.u32 2, %s30
        %v333 = vld [vmem:[#allocation2] sm:$0xf]
        %v334 = vld [vmem:[#allocation2 + $0x4] sm:$0xf]
        %v335 = vld [vmem:[%s275] sm:$0xff]
        %v336 = vld [vmem:[%s275 + $0x8] sm:$0xff]
        %v337 = vld [vmem:[%s275 + $0x10] sm:$0xff]
        %v338 = vld [vmem:[%s275 + $0x18] sm:$0xff]
        %v339 = vld [vmem:[%s275 + $0x20] sm:$0xff]
        %v340 = vld [vmem:[%s275 + $0x28] sm:$0xff]
        %v341 = vld [vmem:[%s275 + $0x30] sm:$0xff]
        %v342 = vld [vmem:[%s275 + $0x38] sm:$0xff]
        %v343 = vld [vmem:[%s275 + $0x40] sm:$0xff]
        %v344 = vld [vmem:[%s275 + $0x48] sm:$0xff]
        %v345 = vld [vmem:[%s275 + $0x50] sm:$0xff]
        %v346 = vld [vmem:[%s275 + $0x58] sm:$0xff]
        %v347 = vld [vmem:[%s275 + $0x60] sm:$0xff]
        %v348 = vld [vmem:[%s275 + $0x68] sm:$0xff]
        %v349 = vld [vmem:[%s275 + $0x70] sm:$0xff]
        %v350 = vld [vmem:[%s275 + $0x78] sm:$0xff]
        %v351 = vld [vmem:[%s275 + $0x80] sm:$0xff]
        %v352 = vld [vmem:[%s275 + $0x88] sm:$0xff]
        %v353 = vld [vmem:[%s275 + $0x90] sm:$0xff]
        %v354 = vld [vmem:[%s275 + $0x98] sm:$0xff]
        %v355 = vld [vmem:[%s275 + $0xa0] sm:$0xff]
        %v356 = vld [vmem:[%s275 + $0xa8] sm:$0xff]
        %v357 = vld [vmem:[%s275 + $0xb0] sm:$0xff]
        %v358 = vld [vmem:[%s275 + $0xb8] sm:$0xff]
        %v359 = vld [vmem:[%s275 + $0xc0] sm:$0xff]
        %v360 = vld [vmem:[%s275 + $0xc8] sm:$0xff]
        %v361 = vld [vmem:[%s275 + $0xd0] sm:$0xff]
        %v362 = vld [vmem:[%s275 + $0xd8] sm:$0xff]
        %v363 = vld [vmem:[%s275 + $0xe0] sm:$0xff]
        %v364 = vld [vmem:[%s275 + $0xe8] sm:$0xff]
        %v365 = vld [vmem:[%s275 + $0xf0] sm:$0xff]
        %v366 = vld [vmem:[%s275 + $0xf8] sm:$0xff]
        %v367 = vld [vmem:[%s275 + $0x100] sm:$0xff]
        %v368 = vld [vmem:[%s275 + $0x108] sm:$0xff]
        %v369 = vld [vmem:[%s275 + $0x110] sm:$0xff]
        %v370 = vld [vmem:[%s275 + $0x118] sm:$0xff]
        %v371 = vld [vmem:[%s275 + $0x120] sm:$0xff]
        %v372 = vld [vmem:[%s275 + $0x128] sm:$0xff]
        %v373 = vld [vmem:[%s275 + $0x130] sm:$0xff]
        %v374 = vld [vmem:[%s275 + $0x138] sm:$0xff]
        %v375 = vld [vmem:[%s275 + $0x140] sm:$0xff]
        %v376 = vld [vmem:[%s275 + $0x148] sm:$0xff]
        %v377 = vld [vmem:[%s275 + $0x150] sm:$0xff]
        %v378 = vld [vmem:[%s275 + $0x158] sm:$0xff]
        %v379 = vld [vmem:[%s275 + $0x160] sm:$0xff]
        %v380 = vld [vmem:[%s275 + $0x168] sm:$0xff]
        %v381 = vld [vmem:[%s275 + $0x170] sm:$0xff]
        %v382 = vld [vmem:[%s275 + $0x178] sm:$0xff]
        %v383 = vld [vmem:[%s275 + $0x180] sm:$0xff]
        %v384 = vld [vmem:[%s275 + $0x188] sm:$0xff]
        %v385 = vld [vmem:[%s275 + $0x190] sm:$0xff]
        %v386 = vld [vmem:[%s275 + $0x198] sm:$0xff]
        %v387 = vld [vmem:[%s275 + $0x1a0] sm:$0xff]
        %v388 = vld [vmem:[%s275 + $0x1a8] sm:$0xff]
        %v389 = vld [vmem:[%s275 + $0x1b0] sm:$0xff]
        %v390 = vld [vmem:[%s275 + $0x1b8] sm:$0xff]
        %v391 = vld [vmem:[%s275 + $0x1c0] sm:$0xff]
        %v392 = vld [vmem:[%s275 + $0x1c8] sm:$0xff]
        %v393 = vld [vmem:[%s275 + $0x1d0] sm:$0xff]
        %v394 = vld [vmem:[%s275 + $0x1d8] sm:$0xff]
        %v395 = vld [vmem:[%s275 + $0x1e0] sm:$0xff]
        %v396 = vld [vmem:[%s275 + $0x1e8] sm:$0xff]
        %v397 = vld [vmem:[%s275 + $0x1f0] sm:$0xff]
        %v398 = vld [vmem:[%s275 + $0x1f8] sm:$0xff]
        %v399 = vld [vmem:[%s284] sm:$0xff]
        %v400 = vld [vmem:[%s284 + $0x8] sm:$0xff]
        %v401 = vld [vmem:[%s284 + $0x10] sm:$0xff]
        %v402 = vld [vmem:[%s284 + $0x18] sm:$0xff]
        %v407 = vlaneseq
        %v408 = vshrl.u32 %v407, 7
        %v409 = vsub.s32 0, %v408
        %v410 = vrot.slane %v399, %v409
        %v411 = vlaneseq
        %v412 = vshrl.u32 %v411, 7
        %v413 = vsub.s32 1, %v412
        %v414 = vrot.slane %v399, %v413
        %v415 = vlaneseq
        %v416 = vshrl.u32 %v415, 7
        %v417 = vsub.s32 2, %v416
        %v418 = vrot.slane %v399, %v417
        %v419 = vlaneseq
        %v420 = vshrl.u32 %v419, 7
        %v421 = vsub.s32 3, %v420
        %v422 = vrot.slane %v399, %v421
        %v423 = vlaneseq
        %v424 = vshrl.u32 %v423, 7
        %v425 = vsub.s32 4, %v424
        %v426 = vrot.slane %v399, %v425
        %v427 = vlaneseq
        %v428 = vshrl.u32 %v427, 7
        %v429 = vsub.s32 5, %v428
        %v430 = vrot.slane %v399, %v429
        %v431 = vlaneseq
        %v432 = vshrl.u32 %v431, 7
        %v433 = vsub.s32 6, %v432
        %v434 = vrot.slane %v399, %v433
        %v435 = vlaneseq
        %v436 = vshrl.u32 %v435, 7
        %v437 = vsub.s32 7, %v436
        %v438 = vrot.slane %v399, %v437
        %v439 = vlaneseq
        %v440 = vshrl.u32 %v439, 7
        %v441 = vsub.s32 0, %v440
        %v442 = vrot.slane %v400, %v441
        %v443 = vlaneseq
        %v444 = vshrl.u32 %v443, 7
        %v445 = vsub.s32 1, %v444
        %v446 = vrot.slane %v400, %v445
        %v447 = vlaneseq
        %v448 = vshrl.u32 %v447, 7
        %v449 = vsub.s32 2, %v448
        %v450 = vrot.slane %v400, %v449
        %v451 = vlaneseq
        %v452 = vshrl.u32 %v451, 7
        %v453 = vsub.s32 3, %v452
        %v454 = vrot.slane %v400, %v453
        %v455 = vlaneseq
        %v456 = vshrl.u32 %v455, 7
        %v457 = vsub.s32 4, %v456
        %v458 = vrot.slane %v400, %v457
        %v459 = vlaneseq
        %v460 = vshrl.u32 %v459, 7
        %v461 = vsub.s32 5, %v460
        %v462 = vrot.slane %v400, %v461
        %v463 = vlaneseq
        %v464 = vshrl.u32 %v463, 7
        %v465 = vsub.s32 6, %v464
        %v466 = vrot.slane %v400, %v465
        %v467 = vlaneseq
        %v468 = vshrl.u32 %v467, 7
        %v469 = vsub.s32 7, %v468
        %v470 = vrot.slane %v400, %v469
        %v471 = vlaneseq
        %v472 = vshrl.u32 %v471, 7
        %v473 = vsub.s32 0, %v472
        %v474 = vrot.slane %v401, %v473
        %v475 = vlaneseq
        %v476 = vshrl.u32 %v475, 7
        %v477 = vsub.s32 1, %v476
        %v478 = vrot.slane %v401, %v477
        %v479 = vlaneseq
        %v480 = vshrl.u32 %v479, 7
        %v481 = vsub.s32 2, %v480
        %v482 = vrot.slane %v401, %v481
        %v483 = vlaneseq
        %v484 = vshrl.u32 %v483, 7
        %v485 = vsub.s32 3, %v484
        %v486 = vrot.slane %v401, %v485
        %v487 = vlaneseq
        %v488 = vshrl.u32 %v487, 7
        %v489 = vsub.s32 4, %v488
        %v490 = vrot.slane %v401, %v489
        %v491 = vlaneseq
        %v492 = vshrl.u32 %v491, 7
        %v493 = vsub.s32 5, %v492
        %v494 = vrot.slane %v401, %v493
        %v495 = vlaneseq
        %v496 = vshrl.u32 %v495, 7
        %v497 = vsub.s32 6, %v496
        %v498 = vrot.slane %v401, %v497
        %v499 = vlaneseq
        %v500 = vshrl.u32 %v499, 7
        %v501 = vsub.s32 7, %v500
        %v502 = vrot.slane %v401, %v501
        %v503 = vlaneseq
        %v504 = vshrl.u32 %v503, 7
        %v505 = vsub.s32 0, %v504
        %v506 = vrot.slane %v402, %v505
        %v507 = vlaneseq
        %v508 = vshrl.u32 %v507, 7
        %v509 = vsub.s32 1, %v508
        %v510 = vrot.slane %v402, %v509
        %v511 = vlaneseq
        %v512 = vshrl.u32 %v511, 7
        %v513 = vsub.s32 2, %v512
        %v514 = vrot.slane %v402, %v513
        %v515 = vlaneseq
        %v516 = vshrl.u32 %v515, 7
        %v517 = vsub.s32 3, %v516
        %v518 = vrot.slane %v402, %v517
        %v519 = vlaneseq
        %v520 = vshrl.u32 %v519, 7
        %v521 = vsub.s32 4, %v520
        %v522 = vrot.slane %v402, %v521
        %v523 = vlaneseq
        %v524 = vshrl.u32 %v523, 7
        %v525 = vsub.s32 5, %v524
        %v526 = vrot.slane %v402, %v525
        %v527 = vlaneseq
        %v528 = vshrl.u32 %v527, 7
        %v529 = vsub.s32 6, %v528
        %v530 = vrot.slane %v402, %v529
        %v531 = vlaneseq
        %v532 = vshrl.u32 %v531, 7
        %v533 = vsub.s32 7, %v532
        %v534 = vrot.slane %v402, %v533
        %v569 = vunpack.c.l.b16 %v333
        %v570 = vunpack.c.l.b16 %v334
        %v571 = vpack.c.b16 %v570, %v569
        %v636 = vunpack.c.l.b16 %v335
        %v637 = vunpack.c.h.b16 %v335
        %v638 = vunpack.c.l.b16 %v336
        %v639 = vunpack.c.h.b16 %v336
        %v640 = vunpack.c.l.b16 %v337
        %v641 = vunpack.c.h.b16 %v337
        %v642 = vunpack.c.l.b16 %v338
        %v643 = vunpack.c.h.b16 %v338
        %v644 = vunpack.c.l.b16 %v339
        %v645 = vunpack.c.h.b16 %v339
        %v646 = vunpack.c.l.b16 %v340
        %v647 = vunpack.c.h.b16 %v340
        %v648 = vunpack.c.l.b16 %v341
        %v649 = vunpack.c.h.b16 %v341
        %v650 = vunpack.c.l.b16 %v342
        %v651 = vunpack.c.h.b16 %v342
        %v652 = vunpack.c.l.b16 %v343
        %v653 = vunpack.c.h.b16 %v343
        %v654 = vunpack.c.l.b16 %v344
        %v655 = vunpack.c.h.b16 %v344
        %v656 = vunpack.c.l.b16 %v345
        %v657 = vunpack.c.h.b16 %v345
        %v658 = vunpack.c.l.b16 %v346
        %v659 = vunpack.c.h.b16 %v346
        %v660 = vunpack.c.l.b16 %v347
        %v661 = vunpack.c.h.b16 %v347
        %v662 = vunpack.c.l.b16 %v348
        %v663 = vunpack.c.h.b16 %v348
        %v664 = vunpack.c.l.b16 %v349
        %v665 = vunpack.c.h.b16 %v349
        %v666 = vunpack.c.l.b16 %v350
        %v667 = vunpack.c.h.b16 %v350
        %v668 = vunpack.c.l.b16 %v351
        %v669 = vunpack.c.h.b16 %v351
        %v670 = vunpack.c.l.b16 %v352
        %v671 = vunpack.c.h.b16 %v352
        %v672 = vunpack.c.l.b16 %v353
        %v673 = vunpack.c.h.b16 %v353
        %v674 = vunpack.c.l.b16 %v354
        %v675 = vunpack.c.h.b16 %v354
        %v676 = vunpack.c.l.b16 %v355
        %v677 = vunpack.c.h.b16 %v355
        %v678 = vunpack.c.l.b16 %v356
        %v679 = vunpack.c.h.b16 %v356
        %v680 = vunpack.c.l.b16 %v357
        %v681 = vunpack.c.h.b16 %v357
        %v682 = vunpack.c.l.b16 %v358
        %v683 = vunpack.c.h.b16 %v358
        %v684 = vunpack.c.l.b16 %v359
        %v685 = vunpack.c.h.b16 %v359
        %v686 = vunpack.c.l.b16 %v360
        %v687 = vunpack.c.h.b16 %v360
        %v688 = vunpack.c.l.b16 %v361
        %v689 = vunpack.c.h.b16 %v361
        %v690 = vunpack.c.l.b16 %v362
        %v691 = vunpack.c.h.b16 %v362
        %v692 = vunpack.c.l.b16 %v363
        %v693 = vunpack.c.h.b16 %v363
        %v694 = vunpack.c.l.b16 %v364
        %v695 = vunpack.c.h.b16 %v364
        %v696 = vunpack.c.l.b16 %v365
        %v697 = vunpack.c.h.b16 %v365
        %v698 = vunpack.c.l.b16 %v366
        %v699 = vunpack.c.h.b16 %v366
        %v700 = vunpack.c.l.b16 %v367
        %v701 = vunpack.c.h.b16 %v367
        %v702 = vunpack.c.l.b16 %v368
        %v703 = vunpack.c.h.b16 %v368
        %v704 = vunpack.c.l.b16 %v369
        %v705 = vunpack.c.h.b16 %v369
        %v706 = vunpack.c.l.b16 %v370
        %v707 = vunpack.c.h.b16 %v370
        %v708 = vunpack.c.l.b16 %v371
        %v709 = vunpack.c.h.b16 %v371
        %v710 = vunpack.c.l.b16 %v372
        %v711 = vunpack.c.h.b16 %v372
        %v712 = vunpack.c.l.b16 %v373
        %v713 = vunpack.c.h.b16 %v373
        %v714 = vunpack.c.l.b16 %v374
        %v715 = vunpack.c.h.b16 %v374
        %v716 = vunpack.c.l.b16 %v375
        %v717 = vunpack.c.h.b16 %v375
        %v718 = vunpack.c.l.b16 %v376
        %v719 = vunpack.c.h.b16 %v376
        %v720 = vunpack.c.l.b16 %v377
        %v721 = vunpack.c.h.b16 %v377
        %v722 = vunpack.c.l.b16 %v378
        %v723 = vunpack.c.h.b16 %v378
        %v724 = vunpack.c.l.b16 %v379
        %v725 = vunpack.c.h.b16 %v379
        %v726 = vunpack.c.l.b16 %v380
        %v727 = vunpack.c.h.b16 %v380
        %v728 = vunpack.c.l.b16 %v381
        %v729 = vunpack.c.h.b16 %v381
        %v730 = vunpack.c.l.b16 %v382
        %v731 = vunpack.c.h.b16 %v382
        %v732 = vunpack.c.l.b16 %v383
        %v733 = vunpack.c.h.b16 %v383
        %v734 = vunpack.c.l.b16 %v384
        %v735 = vunpack.c.h.b16 %v384
        %v736 = vunpack.c.l.b16 %v385
        %v737 = vunpack.c.h.b16 %v385
        %v738 = vunpack.c.l.b16 %v386
        %v739 = vunpack.c.h.b16 %v386
        %v740 = vunpack.c.l.b16 %v387
        %v741 = vunpack.c.h.b16 %v387
        %v742 = vunpack.c.l.b16 %v388
        %v743 = vunpack.c.h.b16 %v388
        %v744 = vunpack.c.l.b16 %v389
        %v745 = vunpack.c.h.b16 %v389
        %v746 = vunpack.c.l.b16 %v390
        %v747 = vunpack.c.h.b16 %v390
        %v748 = vunpack.c.l.b16 %v391
        %v749 = vunpack.c.h.b16 %v391
        %v750 = vunpack.c.l.b16 %v392
        %v751 = vunpack.c.h.b16 %v392
        %v752 = vunpack.c.l.b16 %v393
        %v753 = vunpack.c.h.b16 %v393
        %v754 = vunpack.c.l.b16 %v394
        %v755 = vunpack.c.h.b16 %v394
        %v756 = vunpack.c.l.b16 %v395
        %v757 = vunpack.c.h.b16 %v395
        %v758 = vunpack.c.l.b16 %v396
        %v759 = vunpack.c.h.b16 %v396
        %v760 = vunpack.c.l.b16 %v397
        %v761 = vunpack.c.h.b16 %v397
        %v762 = vunpack.c.l.b16 %v398
        %v763 = vunpack.c.h.b16 %v398
        %v764 = vpack.c.b16 %v668, %v636
        %v765 = vpack.c.b16 %v669, %v637
        %v766 = vpack.c.b16 %v670, %v638
        %v767 = vpack.c.b16 %v671, %v639
        %v768 = vpack.c.b16 %v672, %v640
        %v769 = vpack.c.b16 %v673, %v641
        %v770 = vpack.c.b16 %v674, %v642
        %v771 = vpack.c.b16 %v675, %v643
        %v772 = vpack.c.b16 %v676, %v644
        %v773 = vpack.c.b16 %v677, %v645
        %v774 = vpack.c.b16 %v678, %v646
        %v775 = vpack.c.b16 %v679, %v647
        %v776 = vpack.c.b16 %v680, %v648
        %v777 = vpack.c.b16 %v681, %v649
        %v778 = vpack.c.b16 %v682, %v650
        %v779 = vpack.c.b16 %v683, %v651
        %v780 = vpack.c.b16 %v684, %v652
        %v781 = vpack.c.b16 %v685, %v653
        %v782 = vpack.c.b16 %v686, %v654
        %v783 = vpack.c.b16 %v687, %v655
        %v784 = vpack.c.b16 %v688, %v656
        %v785 = vpack.c.b16 %v689, %v657
        %v786 = vpack.c.b16 %v690, %v658
        %v787 = vpack.c.b16 %v691, %v659
        %v788 = vpack.c.b16 %v692, %v660
        %v789 = vpack.c.b16 %v693, %v661
        %v790 = vpack.c.b16 %v694, %v662
        %v791 = vpack.c.b16 %v695, %v663
        %v792 = vpack.c.b16 %v696, %v664
        %v793 = vpack.c.b16 %v697, %v665
        %v794 = vpack.c.b16 %v698, %v666
        %v795 = vpack.c.b16 %v699, %v667
        %v796 = vpack.c.b16 %v732, %v700
        %v797 = vpack.c.b16 %v733, %v701
        %v798 = vpack.c.b16 %v734, %v702
        %v799 = vpack.c.b16 %v735, %v703
        %v800 = vpack.c.b16 %v736, %v704
        %v801 = vpack.c.b16 %v737, %v705
        %v802 = vpack.c.b16 %v738, %v706
        %v803 = vpack.c.b16 %v739, %v707
        %v804 = vpack.c.b16 %v740, %v708
        %v805 = vpack.c.b16 %v741, %v709
        %v806 = vpack.c.b16 %v742, %v710
        %v807 = vpack.c.b16 %v743, %v711
        %v808 = vpack.c.b16 %v744, %v712
        %v809 = vpack.c.b16 %v745, %v713
        %v810 = vpack.c.b16 %v746, %v714
        %v811 = vpack.c.b16 %v747, %v715
        %v812 = vpack.c.b16 %v748, %v716
        %v813 = vpack.c.b16 %v749, %v717
        %v814 = vpack.c.b16 %v750, %v718
        %v815 = vpack.c.b16 %v751, %v719
        %v816 = vpack.c.b16 %v752, %v720
        %v817 = vpack.c.b16 %v753, %v721
        %v818 = vpack.c.b16 %v754, %v722
        %v819 = vpack.c.b16 %v755, %v723
        %v820 = vpack.c.b16 %v756, %v724
        %v821 = vpack.c.b16 %v757, %v725
        %v822 = vpack.c.b16 %v758, %v726
        %v823 = vpack.c.b16 %v759, %v727
        %v824 = vpack.c.b16 %v760, %v728
        %v825 = vpack.c.b16 %v761, %v729
        %v826 = vpack.c.b16 %v762, %v730
        %v827 = vpack.c.b16 %v763, %v731
        %vm892 = vcmask 261120
        %v894 = vsel %vm892, %v571, 0
        %896 = vmatprep.subr.bf16.mxu0 %v765
        %897 = vmatpush1.bf16.msra.mxu0 %v764
        %898 = vmatprep.subr.bf16.mxu0 %v797
        %899 = vmatpush1.bf16.msra.mxu0 %v796
        %900 = vmatprep.subr.bf16.mxu0 0
        %901 = vmatpush1.bf16.msra.mxu0 0
        %902 = vmatprep.subr.bf16.mxu0 0
        %903 = vmatpush1.bf16.msra.mxu0 0
        %904 = vmatprep.subr.bf16.mxu0 0
        %905 = vmatpush1.bf16.msra.mxu0 0
        %906 = vmatprep.subr.bf16.mxu0 0
        %907 = vmatpush1.bf16.msra.mxu0 0
        %908 = vmatprep.subr.bf16.mxu0 0
        %909 = vmatpush1.bf16.msra.mxu0 0
        %910 = vmatprep.subr.bf16.mxu0 0
        %911 = vmatpush1.bf16.msra.mxu0 0
        %912 = vmatprep.subr.bf16.mxu0 0
        %913 = vmatpush1.bf16.msra.mxu0 0
        %914 = vmatprep.subr.bf16.mxu0 0
        %915 = vmatpush1.bf16.msra.mxu0 0
        %916 = vmatprep.subr.bf16.mxu0 0
        %917 = vmatpush1.bf16.msra.mxu0 0
        %918 = vmatprep.subr.bf16.mxu0 0
        %919 = vmatpush1.bf16.msra.mxu0 0
        %920 = vmatprep.subr.bf16.mxu0 0
        %921 = vmatpush1.bf16.msra.mxu0 0
        %922 = vmatprep.subr.bf16.mxu0 0
        %923 = vmatpush1.bf16.msra.mxu0 0
        %924 = vmatprep.subr.bf16.mxu0 0
        %925 = vmatpush1.bf16.msra.mxu0 0
        %926 = vmatprep.subr.bf16.mxu0 0
        %927 = vmatpush1.bf16.msra.mxu0 0
        %928 = vmatprep.mubr.bf16.mxu0 0
        %929 = vmatmul.mubr.bf16.gmra.mrb[0].mxu0 %v894
        %v930 = vpop.f32.mrb[0].mxu0
        %v931 = vadd.f32 %v410, %v930
        %v932 = vpop.f32.mrb[0].mxu0
        %v933 = vadd.f32 %v414, %v932
        %v934 = vpop.f32.mrb[0].mxu0
        %v935 = vadd.f32 %v410, %v934
        %v936 = vpop.f32.mrb[0].mxu0
        %v937 = vadd.f32 %v414, %v936
        %938 = vdwg.mxu0
        %939 = vmatprep.subr.bf16.mxu0 %v767
        %940 = vmatpush1.bf16.msra.mxu0 %v766
        %941 = vmatprep.subr.bf16.mxu0 %v799
        %942 = vmatpush1.bf16.msra.mxu0 %v798
        %943 = vmatprep.subr.bf16.mxu0 0
        %944 = vmatpush1.bf16.msra.mxu0 0
        %945 = vmatprep.subr.bf16.mxu0 0
        %946 = vmatpush1.bf16.msra.mxu0 0
        %947 = vmatprep.subr.bf16.mxu0 0
        %948 = vmatpush1.bf16.msra.mxu0 0
        %949 = vmatprep.subr.bf16.mxu0 0
        %950 = vmatpush1.bf16.msra.mxu0 0
        %951 = vmatprep.subr.bf16.mxu0 0
        %952 = vmatpush1.bf16.msra.mxu0 0
        %953 = vmatprep.subr.bf16.mxu0 0
        %954 = vmatpush1.bf16.msra.mxu0 0
        %955 = vmatprep.subr.bf16.mxu0 0
        %956 = vmatpush1.bf16.msra.mxu0 0
        %957 = vmatprep.subr.bf16.mxu0 0
        %958 = vmatpush1.bf16.msra.mxu0 0
        %959 = vmatprep.subr.bf16.mxu0 0
        %960 = vmatpush1.bf16.msra.mxu0 0
        %961 = vmatprep.subr.bf16.mxu0 0
        %962 = vmatpush1.bf16.msra.mxu0 0
        %963 = vmatprep.subr.bf16.mxu0 0
        %964 = vmatpush1.bf16.msra.mxu0 0
        %965 = vmatprep.subr.bf16.mxu0 0
        %966 = vmatpush1.bf16.msra.mxu0 0
        %967 = vmatprep.subr.bf16.mxu0 0
        %968 = vmatpush1.bf16.msra.mxu0 0
        %969 = vmatprep.subr.bf16.mxu0 0
        %970 = vmatpush1.bf16.msra.mxu0 0
        %971 = vmatprep.mubr.bf16.mxu0 0
        %972 = vmatmul.mubr.bf16.gmra.mrb[0].mxu0 %v894
        %v973 = vpop.f32.mrb[0].mxu0
        %v974 = vadd.f32 %v418, %v973
        %v975 = vpop.f32.mrb[0].mxu0
        %v976 = vadd.f32 %v422, %v975
        %v977 = vpop.f32.mrb[0].mxu0
        %v978 = vadd.f32 %v418, %v977
        %v979 = vpop.f32.mrb[0].mxu0
        %v980 = vadd.f32 %v422, %v979
        %981 = vdwg.mxu0
        %982 = vmatprep.subr.bf16.mxu0 %v769
        %983 = vmatpush1.bf16.msra.mxu0 %v768
        %984 = vmatprep.subr.bf16.mxu0 %v801
        %985 = vmatpush1.bf16.msra.mxu0 %v800
        %986 = vmatprep.subr.bf16.mxu0 0
        %987 = vmatpush1.bf16.msra.mxu0 0
        %988 = vmatprep.subr.bf16.mxu0 0
        %989 = vmatpush1.bf16.msra.mxu0 0
        %990 = vmatprep.subr.bf16.mxu0 0
        %991 = vmatpush1.bf16.msra.mxu0 0
        %992 = vmatprep.subr.bf16.mxu0 0
        %993 = vmatpush1.bf16.msra.mxu0 0
        %994 = vmatprep.subr.bf16.mxu0 0
        %995 = vmatpush1.bf16.msra.mxu0 0
        %996 = vmatprep.subr.bf16.mxu0 0
        %997 = vmatpush1.bf16.msra.mxu0 0
        %998 = vmatprep.subr.bf16.mxu0 0
        %999 = vmatpush1.bf16.msra.mxu0 0
        %1000 = vmatprep.subr.bf16.mxu0 0
        %1001 = vmatpush1.bf16.msra.mxu0 0
        %1002 = vmatprep.subr.bf16.mxu0 0
        %1003 = vmatpush1.bf16.msra.mxu0 0
        %1004 = vmatprep.subr.bf16.mxu0 0
        %1005 = vmatpush1.bf16.msra.mxu0 0
        %1006 = vmatprep.subr.bf16.mxu0 0
        %1007 = vmatpush1.bf16.msra.mxu0 0
        %1008 = vmatprep.subr.bf16.mxu0 0
        %1009 = vmatpush1.bf16.msra.mxu0 0
        %1010 = vmatprep.subr.bf16.mxu0 0
        %1011 = vmatpush1.bf16.msra.mxu0 0
        %1012 = vmatprep.subr.bf16.mxu0 0
        %1013 = vmatpush1.bf16.msra.mxu0 0
        %1014 = vmatprep.mubr.bf16.mxu0 0
        %1015 = vmatmul.mubr.bf16.gmra.mrb[0].mxu0 %v894
        %v1016 = vpop.f32.mrb[0].mxu0
        %v1017 = vadd.f32 %v426, %v1016
        %v1018 = vpop.f32.mrb[0].mxu0
        %v1019 = vadd.f32 %v430, %v1018
        %v1020 = vpop.f32.mrb[0].mxu0
        %v1021 = vadd.f32 %v426, %v1020
        %v1022 = vpop.f32.mrb[0].mxu0
        %v1023 = vadd.f32 %v430, %v1022
        %1024 = vdwg.mxu0
        %1025 = vmatprep.subr.bf16.mxu0 %v771
        %1026 = vmatpush1.bf16.msra.mxu0 %v770
        %1027 = vmatprep.subr.bf16.mxu0 %v803
        %1028 = vmatpush1.bf16.msra.mxu0 %v802
        %1029 = vmatprep.subr.bf16.mxu0 0
        %1030 = vmatpush1.bf16.msra.mxu0 0
        %1031 = vmatprep.subr.bf16.mxu0 0
        %1032 = vmatpush1.bf16.msra.mxu0 0
        %1033 = vmatprep.subr.bf16.mxu0 0
        %1034 = vmatpush1.bf16.msra.mxu0 0
        %1035 = vmatprep.subr.bf16.mxu0 0
        %1036 = vmatpush1.bf16.msra.mxu0 0
        %1037 = vmatprep.subr.bf16.mxu0 0
        %1038 = vmatpush1.bf16.msra.mxu0 0
        %1039 = vmatprep.subr.bf16.mxu0 0
        %1040 = vmatpush1.bf16.msra.mxu0 0
        %1041 = vmatprep.subr.bf16.mxu0 0
        %1042 = vmatpush1.bf16.msra.mxu0 0
        %1043 = vmatprep.subr.bf16.mxu0 0
        %1044 = vmatpush1.bf16.msra.mxu0 0
        %1045 = vmatprep.subr.bf16.mxu0 0
        %1046 = vmatpush1.bf16.msra.mxu0 0
        %1047 = vmatprep.subr.bf16.mxu0 0
        %1048 = vmatpush1.bf16.msra.mxu0 0
        %1049 = vmatprep.subr.bf16.mxu0 0
        %1050 = vmatpush1.bf16.msra.mxu0 0
        %1051 = vmatprep.subr.bf16.mxu0 0
        %1052 = vmatpush1.bf16.msra.mxu0 0
        %1053 = vmatprep.subr.bf16.mxu0 0
        %1054 = vmatpush1.bf16.msra.mxu0 0
        %1055 = vmatprep.subr.bf16.mxu0 0
        %1056 = vmatpush1.bf16.msra.mxu0 0
        %1057 = vmatprep.mubr.bf16.mxu0 0
        %1058 = vmatmul.mubr.bf16.gmra.mrb[0].mxu0 %v894
        %v1059 = vpop.f32.mrb[0].mxu0
        %v1060 = vadd.f32 %v434, %v1059
        %v1061 = vpop.f32.mrb[0].mxu0
        %v1062 = vadd.f32 %v438, %v1061
        %v1063 = vpop.f32.mrb[0].mxu0
        %v1064 = vadd.f32 %v434, %v1063
        %v1065 = vpop.f32.mrb[0].mxu0
        %v1066 = vadd.f32 %v438, %v1065
        %1067 = vdwg.mxu0
        %1068 = vmatprep.subr.bf16.mxu0 %v773
        %1069 = vmatpush1.bf16.msra.mxu0 %v772
        %1070 = vmatprep.subr.bf16.mxu0 %v805
        %1071 = vmatpush1.bf16.msra.mxu0 %v804
        %1072 = vmatprep.subr.bf16.mxu0 0
        %1073 = vmatpush1.bf16.msra.mxu0 0
        %1074 = vmatprep.subr.bf16.mxu0 0
        %1075 = vmatpush1.bf16.msra.mxu0 0
        %1076 = vmatprep.subr.bf16.mxu0 0
        %1077 = vmatpush1.bf16.msra.mxu0 0
        %1078 = vmatprep.subr.bf16.mxu0 0
        %1079 = vmatpush1.bf16.msra.mxu0 0
        %1080 = vmatprep.subr.bf16.mxu0 0
        %1081 = vmatpush1.bf16.msra.mxu0 0
        %1082 = vmatprep.subr.bf16.mxu0 0
        %1083 = vmatpush1.bf16.msra.mxu0 0
        %1084 = vmatprep.subr.bf16.mxu0 0
        %1085 = vmatpush1.bf16.msra.mxu0 0
        %1086 = vmatprep.subr.bf16.mxu0 0
        %1087 = vmatpush1.bf16.msra.mxu0 0
        %1088 = vmatprep.subr.bf16.mxu0 0
        %1089 = vmatpush1.bf16.msra.mxu0 0
        %1090 = vmatprep.subr.bf16.mxu0 0
        %1091 = vmatpush1.bf16.msra.mxu0 0
        %1092 = vmatprep.subr.bf16.mxu0 0
        %1093 = vmatpush1.bf16.msra.mxu0 0
        %1094 = vmatprep.subr.bf16.mxu0 0
        %1095 = vmatpush1.bf16.msra.mxu0 0
        %1096 = vmatprep.subr.bf16.mxu0 0
        %1097 = vmatpush1.bf16.msra.mxu0 0
        %1098 = vmatprep.subr.bf16.mxu0 0
        %1099 = vmatpush1.bf16.msra.mxu0 0
        %1100 = vmatprep.mubr.bf16.mxu0 0
        %1101 = vmatmul.mubr.bf16.gmra.mrb[0].mxu0 %v894
        %v1102 = vpop.f32.mrb[0].mxu0
        %v1103 = vadd.f32 %v442, %v1102
        %v1104 = vpop.f32.mrb[0].mxu0
        %v1105 = vadd.f32 %v446, %v1104
        %v1106 = vpop.f32.mrb[0].mxu0
        %v1107 = vadd.f32 %v442, %v1106
        %v1108 = vpop.f32.mrb[0].mxu0
        %v1109 = vadd.f32 %v446, %v1108
        %1110 = vdwg.mxu0
        %1111 = vmatprep.subr.bf16.mxu0 %v775
        %1112 = vmatpush1.bf16.msra.mxu0 %v774
        %1113 = vmatprep.subr.bf16.mxu0 %v807
        %1114 = vmatpush1.bf16.msra.mxu0 %v806
        %1115 = vmatprep.subr.bf16.mxu0 0
        %1116 = vmatpush1.bf16.msra.mxu0 0
        %1117 = vmatprep.subr.bf16.mxu0 0
        %1118 = vmatpush1.bf16.msra.mxu0 0
        %1119 = vmatprep.subr.bf16.mxu0 0
        %1120 = vmatpush1.bf16.msra.mxu0 0
        %1121 = vmatprep.subr.bf16.mxu0 0
        %1122 = vmatpush1.bf16.msra.mxu0 0
        %1123 = vmatprep.subr.bf16.mxu0 0
        %1124 = vmatpush1.bf16.msra.mxu0 0
        %1125 = vmatprep.subr.bf16.mxu0 0
        %1126 = vmatpush1.bf16.msra.mxu0 0
        %1127 = vmatprep.subr.bf16.mxu0 0
        %1128 = vmatpush1.bf16.msra.mxu0 0
        %1129 = vmatprep.subr.bf16.mxu0 0
        %1130 = vmatpush1.bf16.msra.mxu0 0
        %1131 = vmatprep.subr.bf16.mxu0 0
        %1132 = vmatpush1.bf16.msra.mxu0 0
        %1133 = vmatprep.subr.bf16.mxu0 0
        %1134 = vmatpush1.bf16.msra.mxu0 0
        %1135 = vmatprep.subr.bf16.mxu0 0
        %1136 = vmatpush1.bf16.msra.mxu0 0
        %1137 = vmatprep.subr.bf16.mxu0 0
        %1138 = vmatpush1.bf16.msra.mxu0 0
        %1139 = vmatprep.subr.bf16.mxu0 0
        %1140 = vmatpush1.bf16.msra.mxu0 0
        %1141 = vmatprep.subr.bf16.mxu0 0
        %1142 = vmatpush1.bf16.msra.mxu0 0
        %1143 = vmatprep.mubr.bf16.mxu0 0
        %1144 = vmatmul.mubr.bf16.gmra.mrb[0].mxu0 %v894
        %v1145 = vpop.f32.mrb[0].mxu0
        %v1146 = vadd.f32 %v450, %v1145
        %v1147 = vpop.f32.mrb[0].mxu0
        %v1148 = vadd.f32 %v454, %v1147
        %v1149 = vpop.f32.mrb[0].mxu0
        %v1150 = vadd.f32 %v450, %v1149
        %v1151 = vpop.f32.mrb[0].mxu0
        %v1152 = vadd.f32 %v454, %v1151
        %1153 = vdwg.mxu0
        %1154 = vmatprep.subr.bf16.mxu0 %v777
        %1155 = vmatpush1.bf16.msra.mxu0 %v776
        %1156 = vmatprep.subr.bf16.mxu0 %v809
        %1157 = vmatpush1.bf16.msra.mxu0 %v808
        %1158 = vmatprep.subr.bf16.mxu0 0
        %1159 = vmatpush1.bf16.msra.mxu0 0
        %1160 = vmatprep.subr.bf16.mxu0 0
        %1161 = vmatpush1.bf16.msra.mxu0 0
        %1162 = vmatprep.subr.bf16.mxu0 0
        %1163 = vmatpush1.bf16.msra.mxu0 0
        %1164 = vmatprep.subr.bf16.mxu0 0
        %1165 = vmatpush1.bf16.msra.mxu0 0
        %1166 = vmatprep.subr.bf16.mxu0 0
        %1167 = vmatpush1.bf16.msra.mxu0 0
        %1168 = vmatprep.subr.bf16.mxu0 0
        %1169 = vmatpush1.bf16.msra.mxu0 0
        %1170 = vmatprep.subr.bf16.mxu0 0
        %1171 = vmatpush1.bf16.msra.mxu0 0
        %1172 = vmatprep.subr.bf16.mxu0 0
        %1173 = vmatpush1.bf16.msra.mxu0 0
        %1174 = vmatprep.subr.bf16.mxu0 0
        %1175 = vmatpush1.bf16.msra.mxu0 0
        %1176 = vmatprep.subr.bf16.mxu0 0
        %1177 = vmatpush1.bf16.msra.mxu0 0
        %1178 = vmatprep.subr.bf16.mxu0 0
        %1179 = vmatpush1.bf16.msra.mxu0 0
        %1180 = vmatprep.subr.bf16.mxu0 0
        %1181 = vmatpush1.bf16.msra.mxu0 0
        %1182 = vmatprep.subr.bf16.mxu0 0
        %1183 = vmatpush1.bf16.msra.mxu0 0
        %1184 = vmatprep.subr.bf16.mxu0 0
        %1185 = vmatpush1.bf16.msra.mxu0 0
        %1186 = vmatprep.mubr.bf16.mxu0 0
        %1187 = vmatmul.mubr.bf16.gmra.mrb[0].mxu0 %v894
        %v1188 = vpop.f32.mrb[0].mxu0
        %v1189 = vadd.f32 %v458, %v1188
        %v1190 = vpop.f32.mrb[0].mxu0
        %v1191 = vadd.f32 %v462, %v1190
        %v1192 = vpop.f32.mrb[0].mxu0
        %v1193 = vadd.f32 %v458, %v1192
        %v1194 = vpop.f32.mrb[0].mxu0
        %v1195 = vadd.f32 %v462, %v1194
        %1196 = vdwg.mxu0
        %1197 = vmatprep.subr.bf16.mxu0 %v779
        %1198 = vmatpush1.bf16.msra.mxu0 %v778
        %1199 = vmatprep.subr.bf16.mxu0 %v811
        %1200 = vmatpush1.bf16.msra.mxu0 %v810
        %1201 = vmatprep.subr.bf16.mxu0 0
        %1202 = vmatpush1.bf16.msra.mxu0 0
        %1203 = vmatprep.subr.bf16.mxu0 0
        %1204 = vmatpush1.bf16.msra.mxu0 0
        %1205 = vmatprep.subr.bf16.mxu0 0
        %1206 = vmatpush1.bf16.msra.mxu0 0
        %1207 = vmatprep.subr.bf16.mxu0 0
        %1208 = vmatpush1.bf16.msra.mxu0 0
        %1209 = vmatprep.subr.bf16.mxu0 0
        %1210 = vmatpush1.bf16.msra.mxu0 0
        %1211 = vmatprep.subr.bf16.mxu0 0
        %1212 = vmatpush1.bf16.msra.mxu0 0
        %1213 = vmatprep.subr.bf16.mxu0 0
        %1214 = vmatpush1.bf16.msra.mxu0 0
        %1215 = vmatprep.subr.bf16.mxu0 0
        %1216 = vmatpush1.bf16.msra.mxu0 0
        %1217 = vmatprep.subr.bf16.mxu0 0
        %1218 = vmatpush1.bf16.msra.mxu0 0
        %1219 = vmatprep.subr.bf16.mxu0 0
        %1220 = vmatpush1.bf16.msra.mxu0 0
        %1221 = vmatprep.subr.bf16.mxu0 0
        %1222 = vmatpush1.bf16.msra.mxu0 0
        %1223 = vmatprep.subr.bf16.mxu0 0
        %1224 = vmatpush1.bf16.msra.mxu0 0
        %1225 = vmatprep.subr.bf16.mxu0 0
        %1226 = vmatpush1.bf16.msra.mxu0 0
        %1227 = vmatprep.subr.bf16.mxu0 0
        %1228 = vmatpush1.bf16.msra.mxu0 0
        %1229 = vmatprep.mubr.bf16.mxu0 0
        %1230 = vmatmul.mubr.bf16.gmra.mrb[0].mxu0 %v894
        %v1231 = vpop.f32.mrb[0].mxu0
        %v1232 = vadd.f32 %v466, %v1231
        %v1233 = vpop.f32.mrb[0].mxu0
        %v1234 = vadd.f32 %v470, %v1233
        %v1235 = vpop.f32.mrb[0].mxu0
        %v1236 = vadd.f32 %v466, %v1235
        %v1237 = vpop.f32.mrb[0].mxu0
        %v1238 = vadd.f32 %v470, %v1237
        %1239 = vdwg.mxu0
        %1240 = vmatprep.subr.bf16.mxu0 %v781
        %1241 = vmatpush1.bf16.msra.mxu0 %v780
        %1242 = vmatprep.subr.bf16.mxu0 %v813
        %1243 = vmatpush1.bf16.msra.mxu0 %v812
        %1244 = vmatprep.subr.bf16.mxu0 0
        %1245 = vmatpush1.bf16.msra.mxu0 0
        %1246 = vmatprep.subr.bf16.mxu0 0
        %1247 = vmatpush1.bf16.msra.mxu0 0
        %1248 = vmatprep.subr.bf16.mxu0 0
        %1249 = vmatpush1.bf16.msra.mxu0 0
        %1250 = vmatprep.subr.bf16.mxu0 0
        %1251 = vmatpush1.bf16.msra.mxu0 0
        %1252 = vmatprep.subr.bf16.mxu0 0
        %1253 = vmatpush1.bf16.msra.mxu0 0
        %1254 = vmatprep.subr.bf16.mxu0 0
        %1255 = vmatpush1.bf16.msra.mxu0 0
        %1256 = vmatprep.subr.bf16.mxu0 0
        %1257 = vmatpush1.bf16.msra.mxu0 0
        %1258 = vmatprep.subr.bf16.mxu0 0
        %1259 = vmatpush1.bf16.msra.mxu0 0
        %1260 = vmatprep.subr.bf16.mxu0 0
        %1261 = vmatpush1.bf16.msra.mxu0 0
        %1262 = vmatprep.subr.bf16.mxu0 0
        %1263 = vmatpush1.bf16.msra.mxu0 0
        %1264 = vmatprep.subr.bf16.mxu0 0
        %1265 = vmatpush1.bf16.msra.mxu0 0
        %1266 = vmatprep.subr.bf16.mxu0 0
        %1267 = vmatpush1.bf16.msra.mxu0 0
        %1268 = vmatprep.subr.bf16.mxu0 0
        %1269 = vmatpush1.bf16.msra.mxu0 0
        %1270 = vmatprep.subr.bf16.mxu0 0
        %1271 = vmatpush1.bf16.msra.mxu0 0
        %1272 = vmatprep.mubr.bf16.mxu0 0
        %1273 = vmatmul.mubr.bf16.gmra.mrb[0].mxu0 %v894
        %v1274 = vpop.f32.mrb[0].mxu0
        %v1275 = vadd.f32 %v474, %v1274
        %v1276 = vpop.f32.mrb[0].mxu0
        %v1277 = vadd.f32 %v478, %v1276
        %v1278 = vpop.f32.mrb[0].mxu0
        %v1279 = vadd.f32 %v474, %v1278
        %v1280 = vpop.f32.mrb[0].mxu0
        %v1281 = vadd.f32 %v478, %v1280
        %1282 = vdwg.mxu0
        %1283 = vmatprep.subr.bf16.mxu0 %v783
        %1284 = vmatpush1.bf16.msra.mxu0 %v782
        %1285 = vmatprep.subr.bf16.mxu0 %v815
        %1286 = vmatpush1.bf16.msra.mxu0 %v814
        %1287 = vmatprep.subr.bf16.mxu0 0
        %1288 = vmatpush1.bf16.msra.mxu0 0
        %1289 = vmatprep.subr.bf16.mxu0 0
        %1290 = vmatpush1.bf16.msra.mxu0 0
        %1291 = vmatprep.subr.bf16.mxu0 0
        %1292 = vmatpush1.bf16.msra.mxu0 0
        %1293 = vmatprep.subr.bf16.mxu0 0
        %1294 = vmatpush1.bf16.msra.mxu0 0
        %1295 = vmatprep.subr.bf16.mxu0 0
        %1296 = vmatpush1.bf16.msra.mxu0 0
        %1297 = vmatprep.subr.bf16.mxu0 0
        %1298 = vmatpush1.bf16.msra.mxu0 0
        %1299 = vmatprep.subr.bf16.mxu0 0
        %1300 = vmatpush1.bf16.msra.mxu0 0
        %1301 = vmatprep.subr.bf16.mxu0 0
        %1302 = vmatpush1.bf16.msra.mxu0 0
        %1303 = vmatprep.subr.bf16.mxu0 0
        %1304 = vmatpush1.bf16.msra.mxu0 0
        %1305 = vmatprep.subr.bf16.mxu0 0
        %1306 = vmatpush1.bf16.msra.mxu0 0
        %1307 = vmatprep.subr.bf16.mxu0 0
        %1308 = vmatpush1.bf16.msra.mxu0 0
        %1309 = vmatprep.subr.bf16.mxu0 0
        %1310 = vmatpush1.bf16.msra.mxu0 0
        %1311 = vmatprep.subr.bf16.mxu0 0
        %1312 = vmatpush1.bf16.msra.mxu0 0
        %1313 = vmatprep.subr.bf16.mxu0 0
        %1314 = vmatpush1.bf16.msra.mxu0 0
        %1315 = vmatprep.mubr.bf16.mxu0 0
        %1316 = vmatmul.mubr.bf16.gmra.mrb[0].mxu0 %v894
        %v1317 = vpop.f32.mrb[0].mxu0
        %v1318 = vadd.f32 %v482, %v1317
        %v1319 = vpop.f32.mrb[0].mxu0
        %v1320 = vadd.f32 %v486, %v1319
        %v1321 = vpop.f32.mrb[0].mxu0
        %v1322 = vadd.f32 %v482, %v1321
        %v1323 = vpop.f32.mrb[0].mxu0
        %v1324 = vadd.f32 %v486, %v1323
        %1325 = vdwg.mxu0
        %1326 = vmatprep.subr.bf16.mxu0 %v785
        %1327 = vmatpush1.bf16.msra.mxu0 %v784
        %1328 = vmatprep.subr.bf16.mxu0 %v817
        %1329 = vmatpush1.bf16.msra.mxu0 %v816
        %1330 = vmatprep.subr.bf16.mxu0 0
        %1331 = vmatpush1.bf16.msra.mxu0 0
        %1332 = vmatprep.subr.bf16.mxu0 0
        %1333 = vmatpush1.bf16.msra.mxu0 0
        %1334 = vmatprep.subr.bf16.mxu0 0
        %1335 = vmatpush1.bf16.msra.mxu0 0
        %1336 = vmatprep.subr.bf16.mxu0 0
        %1337 = vmatpush1.bf16.msra.mxu0 0
        %1338 = vmatprep.subr.bf16.mxu0 0
        %1339 = vmatpush1.bf16.msra.mxu0 0
        %1340 = vmatprep.subr.bf16.mxu0 0
        %1341 = vmatpush1.bf16.msra.mxu0 0
        %1342 = vmatprep.subr.bf16.mxu0 0
        %1343 = vmatpush1.bf16.msra.mxu0 0
        %1344 = vmatprep.subr.bf16.mxu0 0
        %1345 = vmatpush1.bf16.msra.mxu0 0
        %1346 = vmatprep.subr.bf16.mxu0 0
        %1347 = vmatpush1.bf16.msra.mxu0 0
        %1348 = vmatprep.subr.bf16.mxu0 0
        %1349 = vmatpush1.bf16.msra.mxu0 0
        %1350 = vmatprep.subr.bf16.mxu0 0
        %1351 = vmatpush1.bf16.msra.mxu0 0
        %1352 = vmatprep.subr.bf16.mxu0 0
        %1353 = vmatpush1.bf16.msra.mxu0 0
        %1354 = vmatprep.subr.bf16.mxu0 0
        %1355 = vmatpush1.bf16.msra.mxu0 0
        %1356 = vmatprep.subr.bf16.mxu0 0
        %1357 = vmatpush1.bf16.msra.mxu0 0
        %1358 = vmatprep.mubr.bf16.mxu0 0
        %1359 = vmatmul.mubr.bf16.gmra.mrb[0].mxu0 %v894
        %v1360 = vpop.f32.mrb[0].mxu0
        %v1361 = vadd.f32 %v490, %v1360
        %v1362 = vpop.f32.mrb[0].mxu0
        %v1363 = vadd.f32 %v494, %v1362
        %v1364 = vpop.f32.mrb[0].mxu0
        %v1365 = vadd.f32 %v490, %v1364
        %v1366 = vpop.f32.mrb[0].mxu0
        %v1367 = vadd.f32 %v494, %v1366
        %1368 = vdwg.mxu0
        %1369 = vmatprep.subr.bf16.mxu0 %v787
        %1370 = vmatpush1.bf16.msra.mxu0 %v786
        %1371 = vmatprep.subr.bf16.mxu0 %v819
        %1372 = vmatpush1.bf16.msra.mxu0 %v818
        %1373 = vmatprep.subr.bf16.mxu0 0
        %1374 = vmatpush1.bf16.msra.mxu0 0
        %1375 = vmatprep.subr.bf16.mxu0 0
        %1376 = vmatpush1.bf16.msra.mxu0 0
        %1377 = vmatprep.subr.bf16.mxu0 0
        %1378 = vmatpush1.bf16.msra.mxu0 0
        %1379 = vmatprep.subr.bf16.mxu0 0
        %1380 = vmatpush1.bf16.msra.mxu0 0
        %1381 = vmatprep.subr.bf16.mxu0 0
        %1382 = vmatpush1.bf16.msra.mxu0 0
        %1383 = vmatprep.subr.bf16.mxu0 0
        %1384 = vmatpush1.bf16.msra.mxu0 0
        %1385 = vmatprep.subr.bf16.mxu0 0
        %1386 = vmatpush1.bf16.msra.mxu0 0
        %1387 = vmatprep.subr.bf16.mxu0 0
        %1388 = vmatpush1.bf16.msra.mxu0 0
        %1389 = vmatprep.subr.bf16.mxu0 0
        %1390 = vmatpush1.bf16.msra.mxu0 0
        %1391 = vmatprep.subr.bf16.mxu0 0
        %1392 = vmatpush1.bf16.msra.mxu0 0
        %1393 = vmatprep.subr.bf16.mxu0 0
        %1394 = vmatpush1.bf16.msra.mxu0 0
        %1395 = vmatprep.subr.bf16.mxu0 0
        %1396 = vmatpush1.bf16.msra.mxu0 0
        %1397 = vmatprep.subr.bf16.mxu0 0
        %1398 = vmatpush1.bf16.msra.mxu0 0
        %1399 = vmatprep.subr.bf16.mxu0 0
        %1400 = vmatpush1.bf16.msra.mxu0 0
        %1401 = vmatprep.mubr.bf16.mxu0 0
        %1402 = vmatmul.mubr.bf16.gmra.mrb[0].mxu0 %v894
        %v1403 = vpop.f32.mrb[0].mxu0
        %v1404 = vadd.f32 %v498, %v1403
        %v1405 = vpop.f32.mrb[0].mxu0
        %v1406 = vadd.f32 %v502, %v1405
        %v1407 = vpop.f32.mrb[0].mxu0
        %v1408 = vadd.f32 %v498, %v1407
        %v1409 = vpop.f32.mrb[0].mxu0
        %v1410 = vadd.f32 %v502, %v1409
        %1411 = vdwg.mxu0
        %1412 = vmatprep.subr.bf16.mxu0 %v789
        %1413 = vmatpush1.bf16.msra.mxu0 %v788
        %1414 = vmatprep.subr.bf16.mxu0 %v821
        %1415 = vmatpush1.bf16.msra.mxu0 %v820
        %1416 = vmatprep.subr.bf16.mxu0 0
        %1417 = vmatpush1.bf16.msra.mxu0 0
        %1418 = vmatprep.subr.bf16.mxu0 0
        %1419 = vmatpush1.bf16.msra.mxu0 0
        %1420 = vmatprep.subr.bf16.mxu0 0
        %1421 = vmatpush1.bf16.msra.mxu0 0
        %1422 = vmatprep.subr.bf16.mxu0 0
        %1423 = vmatpush1.bf16.msra.mxu0 0
        %1424 = vmatprep.subr.bf16.mxu0 0
        %1425 = vmatpush1.bf16.msra.mxu0 0
        %1426 = vmatprep.subr.bf16.mxu0 0
        %1427 = vmatpush1.bf16.msra.mxu0 0
        %1428 = vmatprep.subr.bf16.mxu0 0
        %1429 = vmatpush1.bf16.msra.mxu0 0
        %1430 = vmatprep.subr.bf16.mxu0 0
        %1431 = vmatpush1.bf16.msra.mxu0 0
        %1432 = vmatprep.subr.bf16.mxu0 0
        %1433 = vmatpush1.bf16.msra.mxu0 0
        %1434 = vmatprep.subr.bf16.mxu0 0
        %1435 = vmatpush1.bf16.msra.mxu0 0
        %1436 = vmatprep.subr.bf16.mxu0 0
        %1437 = vmatpush1.bf16.msra.mxu0 0
        %1438 = vmatprep.subr.bf16.mxu0 0
        %1439 = vmatpush1.bf16.msra.mxu0 0
        %1440 = vmatprep.subr.bf16.mxu0 0
        %1441 = vmatpush1.bf16.msra.mxu0 0
        %1442 = vmatprep.subr.bf16.mxu0 0
        %1443 = vmatpush1.bf16.msra.mxu0 0
        %1444 = vmatprep.mubr.bf16.mxu0 0
        %1445 = vmatmul.mubr.bf16.gmra.mrb[0].mxu0 %v894
        %v1446 = vpop.f32.mrb[0].mxu0
        %v1447 = vadd.f32 %v506, %v1446
        %v1448 = vpop.f32.mrb[0].mxu0
        %v1449 = vadd.f32 %v510, %v1448
        %v1450 = vpop.f32.mrb[0].mxu0
        %v1451 = vadd.f32 %v506, %v1450
        %v1452 = vpop.f32.mrb[0].mxu0
        %v1453 = vadd.f32 %v510, %v1452
        %1454 = vdwg.mxu0
        %1455 = vmatprep.subr.bf16.mxu0 %v791
        %1456 = vmatpush1.bf16.msra.mxu0 %v790
        %1457 = vmatprep.subr.bf16.mxu0 %v823
        %1458 = vmatpush1.bf16.msra.mxu0 %v822
        %1459 = vmatprep.subr.bf16.mxu0 0
        %1460 = vmatpush1.bf16.msra.mxu0 0
        %1461 = vmatprep.subr.bf16.mxu0 0
        %1462 = vmatpush1.bf16.msra.mxu0 0
        %1463 = vmatprep.subr.bf16.mxu0 0
        %1464 = vmatpush1.bf16.msra.mxu0 0
        %1465 = vmatprep.subr.bf16.mxu0 0
        %1466 = vmatpush1.bf16.msra.mxu0 0
        %1467 = vmatprep.subr.bf16.mxu0 0
        %1468 = vmatpush1.bf16.msra.mxu0 0
        %1469 = vmatprep.subr.bf16.mxu0 0
        %1470 = vmatpush1.bf16.msra.mxu0 0
        %1471 = vmatprep.subr.bf16.mxu0 0
        %1472 = vmatpush1.bf16.msra.mxu0 0
        %1473 = vmatprep.subr.bf16.mxu0 0
        %1474 = vmatpush1.bf16.msra.mxu0 0
        %1475 = vmatprep.subr.bf16.mxu0 0
        %1476 = vmatpush1.bf16.msra.mxu0 0
        %1477 = vmatprep.subr.bf16.mxu0 0
        %1478 = vmatpush1.bf16.msra.mxu0 0
        %1479 = vmatprep.subr.bf16.mxu0 0
        %1480 = vmatpush1.bf16.msra.mxu0 0
        %1481 = vmatprep.subr.bf16.mxu0 0
        %1482 = vmatpush1.bf16.msra.mxu0 0
        %1483 = vmatprep.subr.bf16.mxu0 0
        %1484 = vmatpush1.bf16.msra.mxu0 0
        %1485 = vmatprep.subr.bf16.mxu0 0
        %1486 = vmatpush1.bf16.msra.mxu0 0
        %1487 = vmatprep.mubr.bf16.mxu0 0
        %1488 = vmatmul.mubr.bf16.gmra.mrb[0].mxu0 %v894
        %v1489 = vpop.f32.mrb[0].mxu0
        %v1490 = vadd.f32 %v514, %v1489
        %v1491 = vpop.f32.mrb[0].mxu0
        %v1492 = vadd.f32 %v518, %v1491
        %v1493 = vpop.f32.mrb[0].mxu0
        %v1494 = vadd.f32 %v514, %v1493
        %v1495 = vpop.f32.mrb[0].mxu0
        %v1496 = vadd.f32 %v518, %v1495
        %1497 = vdwg.mxu0
        %1498 = vmatprep.subr.bf16.mxu0 %v793
        %1499 = vmatpush1.bf16.msra.mxu0 %v792
        %1500 = vmatprep.subr.bf16.mxu0 %v825
        %1501 = vmatpush1.bf16.msra.mxu0 %v824
        %1502 = vmatprep.subr.bf16.mxu0 0
        %1503 = vmatpush1.bf16.msra.mxu0 0
        %1504 = vmatprep.subr.bf16.mxu0 0
        %1505 = vmatpush1.bf16.msra.mxu0 0
        %1506 = vmatprep.subr.bf16.mxu0 0
        %1507 = vmatpush1.bf16.msra.mxu0 0
        %1508 = vmatprep.subr.bf16.mxu0 0
        %1509 = vmatpush1.bf16.msra.mxu0 0
        %1510 = vmatprep.subr.bf16.mxu0 0
        %1511 = vmatpush1.bf16.msra.mxu0 0
        %1512 = vmatprep.subr.bf16.mxu0 0
        %1513 = vmatpush1.bf16.msra.mxu0 0
        %1514 = vmatprep.subr.bf16.mxu0 0
        %1515 = vmatpush1.bf16.msra.mxu0 0
        %1516 = vmatprep.subr.bf16.mxu0 0
        %1517 = vmatpush1.bf16.msra.mxu0 0
        %1518 = vmatprep.subr.bf16.mxu0 0
        %1519 = vmatpush1.bf16.msra.mxu0 0
        %1520 = vmatprep.subr.bf16.mxu0 0
        %1521 = vmatpush1.bf16.msra.mxu0 0
        %1522 = vmatprep.subr.bf16.mxu0 0
        %1523 = vmatpush1.bf16.msra.mxu0 0
        %1524 = vmatprep.subr.bf16.mxu0 0
        %1525 = vmatpush1.bf16.msra.mxu0 0
        %1526 = vmatprep.subr.bf16.mxu0 0
        %1527 = vmatpush1.bf16.msra.mxu0 0
        %1528 = vmatprep.subr.bf16.mxu0 0
        %1529 = vmatpush1.bf16.msra.mxu0 0
        %1530 = vmatprep.mubr.bf16.mxu0 0
        %1531 = vmatmul.mubr.bf16.gmra.mrb[0].mxu0 %v894
        %v1532 = vpop.f32.mrb[0].mxu0
        %v1533 = vadd.f32 %v522, %v1532
        %v1534 = vpop.f32.mrb[0].mxu0
        %v1535 = vadd.f32 %v526, %v1534
        %v1536 = vpop.f32.mrb[0].mxu0
        %v1537 = vadd.f32 %v522, %v1536
        %v1538 = vpop.f32.mrb[0].mxu0
        %v1539 = vadd.f32 %v526, %v1538
        %1540 = vdwg.mxu0
        %1541 = vmatprep.subr.bf16.mxu0 %v795
        %1542 = vmatpush1.bf16.msra.mxu0 %v794
        %1543 = vmatprep.subr.bf16.mxu0 %v827
        %1544 = vmatpush1.bf16.msra.mxu0 %v826
        %1545 = vmatprep.subr.bf16.mxu0 0
        %1546 = vmatpush1.bf16.msra.mxu0 0
        %1547 = vmatprep.subr.bf16.mxu0 0
        %1548 = vmatpush1.bf16.msra.mxu0 0
        %1549 = vmatprep.subr.bf16.mxu0 0
        %1550 = vmatpush1.bf16.msra.mxu0 0
        %1551 = vmatprep.subr.bf16.mxu0 0
        %1552 = vmatpush1.bf16.msra.mxu0 0
        %1553 = vmatprep.subr.bf16.mxu0 0
        %1554 = vmatpush1.bf16.msra.mxu0 0
        %1555 = vmatprep.subr.bf16.mxu0 0
        %1556 = vmatpush1.bf16.msra.mxu0 0
        %1557 = vmatprep.subr.bf16.mxu0 0
        %1558 = vmatpush1.bf16.msra.mxu0 0
        %1559 = vmatprep.subr.bf16.mxu0 0
        %1560 = vmatpush1.bf16.msra.mxu0 0
        %1561 = vmatprep.subr.bf16.mxu0 0
        %1562 = vmatpush1.bf16.msra.mxu0 0
        %1563 = vmatprep.subr.bf16.mxu0 0
        %1564 = vmatpush1.bf16.msra.mxu0 0
        %1565 = vmatprep.subr.bf16.mxu0 0
        %1566 = vmatpush1.bf16.msra.mxu0 0
        %1567 = vmatprep.subr.bf16.mxu0 0
        %1568 = vmatpush1.bf16.msra.mxu0 0
        %1569 = vmatprep.subr.bf16.mxu0 0
        %1570 = vmatpush1.bf16.msra.mxu0 0
        %1571 = vmatprep.subr.bf16.mxu0 0
        %1572 = vmatpush1.bf16.msra.mxu0 0
        %1573 = vmatprep.mubr.bf16.mxu0 0
        %1574 = vmatmul.mubr.bf16.gmra.mrb[0].mxu0 %v894
        %v1575 = vpop.f32.mrb[0].mxu0
        %v1576 = vadd.f32 %v530, %v1575
        %v1577 = vpop.f32.mrb[0].mxu0
        %v1578 = vadd.f32 %v534, %v1577
        %v1579 = vpop.f32.mrb[0].mxu0
        %v1580 = vadd.f32 %v530, %v1579
        %v1581 = vpop.f32.mrb[0].mxu0
        %v1582 = vadd.f32 %v534, %v1581
        %1583 = vdwg.mxu0
        %v1584 = vmax.f32 %v931, 0.0
        %v1585 = vmax.f32 %v933, 0.0
        %v1586 = vmax.f32 %v974, 0.0
        %v1587 = vmax.f32 %v976, 0.0
        %v1588 = vmax.f32 %v1017, 0.0
        %v1589 = vmax.f32 %v1019, 0.0
        %v1590 = vmax.f32 %v1060, 0.0
        %v1591 = vmax.f32 %v1062, 0.0
        %v1592 = vmax.f32 %v1103, 0.0
        %v1593 = vmax.f32 %v1105, 0.0
        %v1594 = vmax.f32 %v1146, 0.0
        %v1595 = vmax.f32 %v1148, 0.0
        %v1596 = vmax.f32 %v1189, 0.0
        %v1597 = vmax.f32 %v1191, 0.0
        %v1598 = vmax.f32 %v1232, 0.0
        %v1599 = vmax.f32 %v1234, 0.0
        %v1600 = vmax.f32 %v1275, 0.0
        %v1601 = vmax.f32 %v1277, 0.0
        %v1602 = vmax.f32 %v1318, 0.0
        %v1603 = vmax.f32 %v1320, 0.0
        %v1604 = vmax.f32 %v1361, 0.0
        %v1605 = vmax.f32 %v1363, 0.0
        %v1606 = vmax.f32 %v1404, 0.0
        %v1607 = vmax.f32 %v1406, 0.0
        %v1608 = vmax.f32 %v1447, 0.0
        %v1609 = vmax.f32 %v1449, 0.0
        %v1610 = vmax.f32 %v1490, 0.0
        %v1611 = vmax.f32 %v1492, 0.0
        %v1612 = vmax.f32 %v1533, 0.0
        %v1613 = vmax.f32 %v1535, 0.0
        %v1614 = vmax.f32 %v1576, 0.0
        %v1615 = vmax.f32 %v1578, 0.0
        %v1616 = vmax.f32 %v935, 0.0
        %v1617 = vmax.f32 %v937, 0.0
        %v1618 = vmax.f32 %v978, 0.0
        %v1619 = vmax.f32 %v980, 0.0
        %v1620 = vmax.f32 %v1021, 0.0
        %v1621 = vmax.f32 %v1023, 0.0
        %v1622 = vmax.f32 %v1064, 0.0
        %v1623 = vmax.f32 %v1066, 0.0
        %v1624 = vmax.f32 %v1107, 0.0
        %v1625 = vmax.f32 %v1109, 0.0
        %v1626 = vmax.f32 %v1150, 0.0
        %v1627 = vmax.f32 %v1152, 0.0
        %v1628 = vmax.f32 %v1193, 0.0
        %v1629 = vmax.f32 %v1195, 0.0
        %v1630 = vmax.f32 %v1236, 0.0
        %v1631 = vmax.f32 %v1238, 0.0
        %v1632 = vmax.f32 %v1279, 0.0
        %v1633 = vmax.f32 %v1281, 0.0
        %v1634 = vmax.f32 %v1322, 0.0
        %v1635 = vmax.f32 %v1324, 0.0
        %v1636 = vmax.f32 %v1365, 0.0
        %v1637 = vmax.f32 %v1367, 0.0
        %v1638 = vmax.f32 %v1408, 0.0
        %v1639 = vmax.f32 %v1410, 0.0
        %v1640 = vmax.f32 %v1451, 0.0
        %v1641 = vmax.f32 %v1453, 0.0
        %v1642 = vmax.f32 %v1494, 0.0
        %v1643 = vmax.f32 %v1496, 0.0
        %v1644 = vmax.f32 %v1537, 0.0
        %v1645 = vmax.f32 %v1539, 0.0
        %v1646 = vmax.f32 %v1580, 0.0
        %v1647 = vmax.f32 %v1582, 0.0
        %v1648 = vld [vmem:[%s293] sm:$0x1]
        %v1649 = vlaneseq
        %v1650 = vshrl.u32 %v1649, 7
        %v1651 = vsub.s32 0, %v1650
        %v1652 = vrot.slane %v1648, %v1651
        %v1653 = vmul.f32 %v1584, %v1652
        %v1654 = vmul.f32 %v1616, %v1652
        %v1655 = vadd.f32 %v1653, 0.0
        %v1656 = vadd.f32 %v1654, 0.0
        %v1657 = vld [vmem:[%s293 + $0x2] sm:$0x1]
        %v1658 = vlaneseq
        %v1659 = vshrl.u32 %v1658, 7
        %v1660 = vsub.s32 0, %v1659
        %v1661 = vrot.slane %v1657, %v1660
        %v1662 = vmul.f32 %v1585, %v1661
        %v1663 = vmul.f32 %v1617, %v1661
        %v1664 = vadd.f32 %v1655, %v1662
        %v1665 = vadd.f32 %v1656, %v1663
        %v1666 = vld [vmem:[%s293 + $0x4] sm:$0x1]
        %v1667 = vlaneseq
        %v1668 = vshrl.u32 %v1667, 7
        %v1669 = vsub.s32 0, %v1668
        %v1670 = vrot.slane %v1666, %v1669
        %v1671 = vmul.f32 %v1586, %v1670
        %v1672 = vmul.f32 %v1618, %v1670
        %v1673 = vadd.f32 %v1664, %v1671
        %v1674 = vadd.f32 %v1665, %v1672
        %v1675 = vld [vmem:[%s293 + $0x6] sm:$0x1]
        %v1676 = vlaneseq
        %v1677 = vshrl.u32 %v1676, 7
        %v1678 = vsub.s32 0, %v1677
        %v1679 = vrot.slane %v1675, %v1678
        %v1680 = vmul.f32 %v1587, %v1679
        %v1681 = vmul.f32 %v1619, %v1679
        %v1682 = vadd.f32 %v1673, %v1680
        %v1683 = vadd.f32 %v1674, %v1681
        %v1684 = vld [vmem:[%s293 + $0x8] sm:$0x1]
        %v1685 = vlaneseq
        %v1686 = vshrl.u32 %v1685, 7
        %v1687 = vsub.s32 0, %v1686
        %v1688 = vrot.slane %v1684, %v1687
        %v1689 = vmul.f32 %v1588, %v1688
        %v1690 = vmul.f32 %v1620, %v1688
        %v1691 = vadd.f32 %v1682, %v1689
        %v1692 = vadd.f32 %v1683, %v1690
        %v1693 = vld [vmem:[%s293 + $0xa] sm:$0x1]
        %v1694 = vlaneseq
        %v1695 = vshrl.u32 %v1694, 7
        %v1696 = vsub.s32 0, %v1695
        %v1697 = vrot.slane %v1693, %v1696
        %v1698 = vmul.f32 %v1589, %v1697
        %v1699 = vmul.f32 %v1621, %v1697
        %v1700 = vadd.f32 %v1691, %v1698
        %v1701 = vadd.f32 %v1692, %v1699
        %v1702 = vld [vmem:[%s293 + $0xc] sm:$0x1]
        %v1703 = vlaneseq
        %v1704 = vshrl.u32 %v1703, 7
        %v1705 = vsub.s32 0, %v1704
        %v1706 = vrot.slane %v1702, %v1705
        %v1707 = vmul.f32 %v1590, %v1706
        %v1708 = vmul.f32 %v1622, %v1706
        %v1709 = vadd.f32 %v1700, %v1707
        %v1710 = vadd.f32 %v1701, %v1708
        %v1711 = vld [vmem:[%s293 + $0xe] sm:$0x1]
        %v1712 = vlaneseq
        %v1713 = vshrl.u32 %v1712, 7
        %v1714 = vsub.s32 0, %v1713
        %v1715 = vrot.slane %v1711, %v1714
        %v1716 = vmul.f32 %v1591, %v1715
        %v1717 = vmul.f32 %v1623, %v1715
        %v1718 = vadd.f32 %v1709, %v1716
        %v1719 = vadd.f32 %v1710, %v1717
        %v1720 = vld [vmem:[%s293 + $0x10] sm:$0x1]
        %v1721 = vlaneseq
        %v1722 = vshrl.u32 %v1721, 7
        %v1723 = vsub.s32 0, %v1722
        %v1724 = vrot.slane %v1720, %v1723
        %v1725 = vmul.f32 %v1592, %v1724
        %v1726 = vmul.f32 %v1624, %v1724
        %v1727 = vadd.f32 %v1718, %v1725
        %v1728 = vadd.f32 %v1719, %v1726
        %v1729 = vld [vmem:[%s293 + $0x12] sm:$0x1]
        %v1730 = vlaneseq
        %v1731 = vshrl.u32 %v1730, 7
        %v1732 = vsub.s32 0, %v1731
        %v1733 = vrot.slane %v1729, %v1732
        %v1734 = vmul.f32 %v1593, %v1733
        %v1735 = vmul.f32 %v1625, %v1733
        %v1736 = vadd.f32 %v1727, %v1734
        %v1737 = vadd.f32 %v1728, %v1735
        %v1738 = vld [vmem:[%s293 + $0x14] sm:$0x1]
        %v1739 = vlaneseq
        %v1740 = vshrl.u32 %v1739, 7
        %v1741 = vsub.s32 0, %v1740
        %v1742 = vrot.slane %v1738, %v1741
        %v1743 = vmul.f32 %v1594, %v1742
        %v1744 = vmul.f32 %v1626, %v1742
        %v1745 = vadd.f32 %v1736, %v1743
        %v1746 = vadd.f32 %v1737, %v1744
        %v1747 = vld [vmem:[%s293 + $0x16] sm:$0x1]
        %v1748 = vlaneseq
        %v1749 = vshrl.u32 %v1748, 7
        %v1750 = vsub.s32 0, %v1749
        %v1751 = vrot.slane %v1747, %v1750
        %v1752 = vmul.f32 %v1595, %v1751
        %v1753 = vmul.f32 %v1627, %v1751
        %v1754 = vadd.f32 %v1745, %v1752
        %v1755 = vadd.f32 %v1746, %v1753
        %v1756 = vld [vmem:[%s293 + $0x18] sm:$0x1]
        %v1757 = vlaneseq
        %v1758 = vshrl.u32 %v1757, 7
        %v1759 = vsub.s32 0, %v1758
        %v1760 = vrot.slane %v1756, %v1759
        %v1761 = vmul.f32 %v1596, %v1760
        %v1762 = vmul.f32 %v1628, %v1760
        %v1763 = vadd.f32 %v1754, %v1761
        %v1764 = vadd.f32 %v1755, %v1762
        %v1765 = vld [vmem:[%s293 + $0x1a] sm:$0x1]
        %v1766 = vlaneseq
        %v1767 = vshrl.u32 %v1766, 7
        %v1768 = vsub.s32 0, %v1767
        %v1769 = vrot.slane %v1765, %v1768
        %v1770 = vmul.f32 %v1597, %v1769
        %v1771 = vmul.f32 %v1629, %v1769
        %v1772 = vadd.f32 %v1763, %v1770
        %v1773 = vadd.f32 %v1764, %v1771
        %v1774 = vld [vmem:[%s293 + $0x1c] sm:$0x1]
        %v1775 = vlaneseq
        %v1776 = vshrl.u32 %v1775, 7
        %v1777 = vsub.s32 0, %v1776
        %v1778 = vrot.slane %v1774, %v1777
        %v1779 = vmul.f32 %v1598, %v1778
        %v1780 = vmul.f32 %v1630, %v1778
        %v1781 = vadd.f32 %v1772, %v1779
        %v1782 = vadd.f32 %v1773, %v1780
        %v1783 = vld [vmem:[%s293 + $0x1e] sm:$0x1]
        %v1784 = vlaneseq
        %v1785 = vshrl.u32 %v1784, 7
        %v1786 = vsub.s32 0, %v1785
        %v1787 = vrot.slane %v1783, %v1786
        %v1788 = vmul.f32 %v1599, %v1787
        %v1789 = vmul.f32 %v1631, %v1787
        %v1790 = vadd.f32 %v1781, %v1788
        %v1791 = vadd.f32 %v1782, %v1789
        %v1792 = vld [vmem:[%s293 + $0x20] sm:$0x1]
        %v1793 = vlaneseq
        %v1794 = vshrl.u32 %v1793, 7
        %v1795 = vsub.s32 0, %v1794
        %v1796 = vrot.slane %v1792, %v1795
        %v1797 = vmul.f32 %v1600, %v1796
        %v1798 = vmul.f32 %v1632, %v1796
        %v1799 = vadd.f32 %v1790, %v1797
        %v1800 = vadd.f32 %v1791, %v1798
        %v1801 = vld [vmem:[%s293 + $0x22] sm:$0x1]
        %v1802 = vlaneseq
        %v1803 = vshrl.u32 %v1802, 7
        %v1804 = vsub.s32 0, %v1803
        %v1805 = vrot.slane %v1801, %v1804
        %v1806 = vmul.f32 %v1601, %v1805
        %v1807 = vmul.f32 %v1633, %v1805
        %v1808 = vadd.f32 %v1799, %v1806
        %v1809 = vadd.f32 %v1800, %v1807
        %v1810 = vld [vmem:[%s293 + $0x24] sm:$0x1]
        %v1811 = vlaneseq
        %v1812 = vshrl.u32 %v1811, 7
        %v1813 = vsub.s32 0, %v1812
        %v1814 = vrot.slane %v1810, %v1813
        %v1815 = vmul.f32 %v1602, %v1814
        %v1816 = vmul.f32 %v1634, %v1814
        %v1817 = vadd.f32 %v1808, %v1815
        %v1818 = vadd.f32 %v1809, %v1816
        %v1819 = vld [vmem:[%s293 + $0x26] sm:$0x1]
        %v1820 = vlaneseq
        %v1821 = vshrl.u32 %v1820, 7
        %v1822 = vsub.s32 0, %v1821
        %v1823 = vrot.slane %v1819, %v1822
        %v1824 = vmul.f32 %v1603, %v1823
        %v1825 = vmul.f32 %v1635, %v1823
        %v1826 = vadd.f32 %v1817, %v1824
        %v1827 = vadd.f32 %v1818, %v1825
        %v1828 = vld [vmem:[%s293 + $0x28] sm:$0x1]
        %v1829 = vlaneseq
        %v1830 = vshrl.u32 %v1829, 7
        %v1831 = vsub.s32 0, %v1830
        %v1832 = vrot.slane %v1828, %v1831
        %v1833 = vmul.f32 %v1604, %v1832
        %v1834 = vmul.f32 %v1636, %v1832
        %v1835 = vadd.f32 %v1826, %v1833
        %v1836 = vadd.f32 %v1827, %v1834
        %v1837 = vld [vmem:[%s293 + $0x2a] sm:$0x1]
        %v1838 = vlaneseq
        %v1839 = vshrl.u32 %v1838, 7
        %v1840 = vsub.s32 0, %v1839
        %v1841 = vrot.slane %v1837, %v1840
        %v1842 = vmul.f32 %v1605, %v1841
        %v1843 = vmul.f32 %v1637, %v1841
        %v1844 = vadd.f32 %v1835, %v1842
        %v1845 = vadd.f32 %v1836, %v1843
        %v1846 = vld [vmem:[%s293 + $0x2c] sm:$0x1]
        %v1847 = vlaneseq
        %v1848 = vshrl.u32 %v1847, 7
        %v1849 = vsub.s32 0, %v1848
        %v1850 = vrot.slane %v1846, %v1849
        %v1851 = vmul.f32 %v1606, %v1850
        %v1852 = vmul.f32 %v1638, %v1850
        %v1853 = vadd.f32 %v1844, %v1851
        %v1854 = vadd.f32 %v1845, %v1852
        %v1855 = vld [vmem:[%s293 + $0x2e] sm:$0x1]
        %v1856 = vlaneseq
        %v1857 = vshrl.u32 %v1856, 7
        %v1858 = vsub.s32 0, %v1857
        %v1859 = vrot.slane %v1855, %v1858
        %v1860 = vmul.f32 %v1607, %v1859
        %v1861 = vmul.f32 %v1639, %v1859
        %v1862 = vadd.f32 %v1853, %v1860
        %v1863 = vadd.f32 %v1854, %v1861
        %v1864 = vld [vmem:[%s293 + $0x30] sm:$0x1]
        %v1865 = vlaneseq
        %v1866 = vshrl.u32 %v1865, 7
        %v1867 = vsub.s32 0, %v1866
        %v1868 = vrot.slane %v1864, %v1867
        %v1869 = vmul.f32 %v1608, %v1868
        %v1870 = vmul.f32 %v1640, %v1868
        %v1871 = vadd.f32 %v1862, %v1869
        %v1872 = vadd.f32 %v1863, %v1870
        %v1873 = vld [vmem:[%s293 + $0x32] sm:$0x1]
        %v1874 = vlaneseq
        %v1875 = vshrl.u32 %v1874, 7
        %v1876 = vsub.s32 0, %v1875
        %v1877 = vrot.slane %v1873, %v1876
        %v1878 = vmul.f32 %v1609, %v1877
        %v1879 = vmul.f32 %v1641, %v1877
        %v1880 = vadd.f32 %v1871, %v1878
        %v1881 = vadd.f32 %v1872, %v1879
        %v1882 = vld [vmem:[%s293 + $0x34] sm:$0x1]
        %v1883 = vlaneseq
        %v1884 = vshrl.u32 %v1883, 7
        %v1885 = vsub.s32 0, %v1884
        %v1886 = vrot.slane %v1882, %v1885
        %v1887 = vmul.f32 %v1610, %v1886
        %v1888 = vmul.f32 %v1642, %v1886
        %v1889 = vadd.f32 %v1880, %v1887
        %v1890 = vadd.f32 %v1881, %v1888
        %v1891 = vld [vmem:[%s293 + $0x36] sm:$0x1]
        %v1892 = vlaneseq
        %v1893 = vshrl.u32 %v1892, 7
        %v1894 = vsub.s32 0, %v1893
        %v1895 = vrot.slane %v1891, %v1894
        %v1896 = vmul.f32 %v1611, %v1895
        %v1897 = vmul.f32 %v1643, %v1895
        %v1898 = vadd.f32 %v1889, %v1896
        %v1899 = vadd.f32 %v1890, %v1897
        %v1900 = vld [vmem:[%s293 + $0x38] sm:$0x1]
        %v1901 = vlaneseq
        %v1902 = vshrl.u32 %v1901, 7
        %v1903 = vsub.s32 0, %v1902
        %v1904 = vrot.slane %v1900, %v1903
        %v1905 = vmul.f32 %v1612, %v1904
        %v1906 = vmul.f32 %v1644, %v1904
        %v1907 = vadd.f32 %v1898, %v1905
        %v1908 = vadd.f32 %v1899, %v1906
        %v1909 = vld [vmem:[%s293 + $0x3a] sm:$0x1]
        %v1910 = vlaneseq
        %v1911 = vshrl.u32 %v1910, 7
        %v1912 = vsub.s32 0, %v1911
        %v1913 = vrot.slane %v1909, %v1912
        %v1914 = vmul.f32 %v1613, %v1913
        %v1915 = vmul.f32 %v1645, %v1913
        %v1916 = vadd.f32 %v1907, %v1914
        %v1917 = vadd.f32 %v1908, %v1915
        %v1918 = vld [vmem:[%s293 + $0x3c] sm:$0x1]
        %v1919 = vlaneseq
        %v1920 = vshrl.u32 %v1919, 7
        %v1921 = vsub.s32 0, %v1920
        %v1922 = vrot.slane %v1918, %v1921
        %v1923 = vmul.f32 %v1614, %v1922
        %v1924 = vmul.f32 %v1646, %v1922
        %v1925 = vadd.f32 %v1916, %v1923
        %v1926 = vadd.f32 %v1917, %v1924
        %v1927 = vld [vmem:[%s293 + $0x3e] sm:$0x1]
        %v1928 = vlaneseq
        %v1929 = vshrl.u32 %v1928, 7
        %v1930 = vsub.s32 0, %v1929
        %v1931 = vrot.slane %v1927, %v1930
        %v1932 = vmul.f32 %v1615, %v1931
        %v1933 = vmul.f32 %v1647, %v1931
        %v1934 = vadd.f32 %v1925, %v1932
        %v1935 = vadd.f32 %v1926, %v1933
        %1936 = vst [vmem:[%s327] sm:$0xff] %v1934
        %1937 = vst [vmem:[%s327 + $0x8] sm:$0xff] %v1935
        %v1938 = vld [vmem:[%s293 + $0x1] sm:$0x1]
        %v1939 = vlaneseq
        %v1940 = vshrl.u32 %v1939, 7
        %v1941 = vsub.s32 0, %v1940
        %v1942 = vrot.slane %v1938, %v1941
        %v1943 = vmul.f32 %v1584, %v1942
        %v1944 = vmul.f32 %v1616, %v1942
        %v1945 = vadd.f32 %v1943, 0.0
        %v1946 = vadd.f32 %v1944, 0.0
        %v1947 = vld [vmem:[%s293 + $0x3] sm:$0x1]
        %v1948 = vlaneseq
        %v1949 = vshrl.u32 %v1948, 7
        %v1950 = vsub.s32 0, %v1949
        %v1951 = vrot.slane %v1947, %v1950
        %v1952 = vmul.f32 %v1585, %v1951
        %v1953 = vmul.f32 %v1617, %v1951
        %v1954 = vadd.f32 %v1945, %v1952
        %v1955 = vadd.f32 %v1946, %v1953
        %v1956 = vld [vmem:[%s293 + $0x5] sm:$0x1]
        %v1957 = vlaneseq
        %v1958 = vshrl.u32 %v1957, 7
        %v1959 = vsub.s32 0, %v1958
        %v1960 = vrot.slane %v1956, %v1959
        %v1961 = vmul.f32 %v1586, %v1960
        %v1962 = vmul.f32 %v1618, %v1960
        %v1963 = vadd.f32 %v1954, %v1961
        %v1964 = vadd.f32 %v1955, %v1962
        %v1965 = vld [vmem:[%s293 + $0x7] sm:$0x1]
        %v1966 = vlaneseq
        %v1967 = vshrl.u32 %v1966, 7
        %v1968 = vsub.s32 0, %v1967
        %v1969 = vrot.slane %v1965, %v1968
        %v1970 = vmul.f32 %v1587, %v1969
        %v1971 = vmul.f32 %v1619, %v1969
        %v1972 = vadd.f32 %v1963, %v1970
        %v1973 = vadd.f32 %v1964, %v1971
        %v1974 = vld [vmem:[%s293 + $0x9] sm:$0x1]
        %v1975 = vlaneseq
        %v1976 = vshrl.u32 %v1975, 7
        %v1977 = vsub.s32 0, %v1976
        %v1978 = vrot.slane %v1974, %v1977
        %v1979 = vmul.f32 %v1588, %v1978
        %v1980 = vmul.f32 %v1620, %v1978
        %v1981 = vadd.f32 %v1972, %v1979
        %v1982 = vadd.f32 %v1973, %v1980
        %v1983 = vld [vmem:[%s293 + $0xb] sm:$0x1]
        %v1984 = vlaneseq
        %v1985 = vshrl.u32 %v1984, 7
        %v1986 = vsub.s32 0, %v1985
        %v1987 = vrot.slane %v1983, %v1986
        %v1988 = vmul.f32 %v1589, %v1987
        %v1989 = vmul.f32 %v1621, %v1987
        %v1990 = vadd.f32 %v1981, %v1988
        %v1991 = vadd.f32 %v1982, %v1989
        %v1992 = vld [vmem:[%s293 + $0xd] sm:$0x1]
        %v1993 = vlaneseq
        %v1994 = vshrl.u32 %v1993, 7
        %v1995 = vsub.s32 0, %v1994
        %v1996 = vrot.slane %v1992, %v1995
        %v1997 = vmul.f32 %v1590, %v1996
        %v1998 = vmul.f32 %v1622, %v1996
        %v1999 = vadd.f32 %v1990, %v1997
        %v2000 = vadd.f32 %v1991, %v1998
        %v2001 = vld [vmem:[%s293 + $0xf] sm:$0x1]
        %v2002 = vlaneseq
        %v2003 = vshrl.u32 %v2002, 7
        %v2004 = vsub.s32 0, %v2003
        %v2005 = vrot.slane %v2001, %v2004
        %v2006 = vmul.f32 %v1591, %v2005
        %v2007 = vmul.f32 %v1623, %v2005
        %v2008 = vadd.f32 %v1999, %v2006
        %v2009 = vadd.f32 %v2000, %v2007
        %v2010 = vld [vmem:[%s293 + $0x11] sm:$0x1]
        %v2011 = vlaneseq
        %v2012 = vshrl.u32 %v2011, 7
        %v2013 = vsub.s32 0, %v2012
        %v2014 = vrot.slane %v2010, %v2013
        %v2015 = vmul.f32 %v1592, %v2014
        %v2016 = vmul.f32 %v1624, %v2014
        %v2017 = vadd.f32 %v2008, %v2015
        %v2018 = vadd.f32 %v2009, %v2016
        %v2019 = vld [vmem:[%s293 + $0x13] sm:$0x1]
        %v2020 = vlaneseq
        %v2021 = vshrl.u32 %v2020, 7
        %v2022 = vsub.s32 0, %v2021
        %v2023 = vrot.slane %v2019, %v2022
        %v2024 = vmul.f32 %v1593, %v2023
        %v2025 = vmul.f32 %v1625, %v2023
        %v2026 = vadd.f32 %v2017, %v2024
        %v2027 = vadd.f32 %v2018, %v2025
        %v2028 = vld [vmem:[%s293 + $0x15] sm:$0x1]
        %v2029 = vlaneseq
        %v2030 = vshrl.u32 %v2029, 7
        %v2031 = vsub.s32 0, %v2030
        %v2032 = vrot.slane %v2028, %v2031
        %v2033 = vmul.f32 %v1594, %v2032
        %v2034 = vmul.f32 %v1626, %v2032
        %v2035 = vadd.f32 %v2026, %v2033
        %v2036 = vadd.f32 %v2027, %v2034
        %v2037 = vld [vmem:[%s293 + $0x17] sm:$0x1]
        %v2038 = vlaneseq
        %v2039 = vshrl.u32 %v2038, 7
        %v2040 = vsub.s32 0, %v2039
        %v2041 = vrot.slane %v2037, %v2040
        %v2042 = vmul.f32 %v1595, %v2041
        %v2043 = vmul.f32 %v1627, %v2041
        %v2044 = vadd.f32 %v2035, %v2042
        %v2045 = vadd.f32 %v2036, %v2043
        %v2046 = vld [vmem:[%s293 + $0x19] sm:$0x1]
        %v2047 = vlaneseq
        %v2048 = vshrl.u32 %v2047, 7
        %v2049 = vsub.s32 0, %v2048
        %v2050 = vrot.slane %v2046, %v2049
        %v2051 = vmul.f32 %v1596, %v2050
        %v2052 = vmul.f32 %v1628, %v2050
        %v2053 = vadd.f32 %v2044, %v2051
        %v2054 = vadd.f32 %v2045, %v2052
        %v2055 = vld [vmem:[%s293 + $0x1b] sm:$0x1]
        %v2056 = vlaneseq
        %v2057 = vshrl.u32 %v2056, 7
        %v2058 = vsub.s32 0, %v2057
        %v2059 = vrot.slane %v2055, %v2058
        %v2060 = vmul.f32 %v1597, %v2059
        %v2061 = vmul.f32 %v1629, %v2059
        %v2062 = vadd.f32 %v2053, %v2060
        %v2063 = vadd.f32 %v2054, %v2061
        %v2064 = vld [vmem:[%s293 + $0x1d] sm:$0x1]
        %v2065 = vlaneseq
        %v2066 = vshrl.u32 %v2065, 7
        %v2067 = vsub.s32 0, %v2066
        %v2068 = vrot.slane %v2064, %v2067
        %v2069 = vmul.f32 %v1598, %v2068
        %v2070 = vmul.f32 %v1630, %v2068
        %v2071 = vadd.f32 %v2062, %v2069
        %v2072 = vadd.f32 %v2063, %v2070
        %v2073 = vld [vmem:[%s293 + $0x1f] sm:$0x1]
        %v2074 = vlaneseq
        %v2075 = vshrl.u32 %v2074, 7
        %v2076 = vsub.s32 0, %v2075
        %v2077 = vrot.slane %v2073, %v2076
        %v2078 = vmul.f32 %v1599, %v2077
        %v2079 = vmul.f32 %v1631, %v2077
        %v2080 = vadd.f32 %v2071, %v2078
        %v2081 = vadd.f32 %v2072, %v2079
        %v2082 = vld [vmem:[%s293 + $0x21] sm:$0x1]
        %v2083 = vlaneseq
        %v2084 = vshrl.u32 %v2083, 7
        %v2085 = vsub.s32 0, %v2084
        %v2086 = vrot.slane %v2082, %v2085
        %v2087 = vmul.f32 %v1600, %v2086
        %v2088 = vmul.f32 %v1632, %v2086
        %v2089 = vadd.f32 %v2080, %v2087
        %v2090 = vadd.f32 %v2081, %v2088
        %v2091 = vld [vmem:[%s293 + $0x23] sm:$0x1]
        %v2092 = vlaneseq
        %v2093 = vshrl.u32 %v2092, 7
        %v2094 = vsub.s32 0, %v2093
        %v2095 = vrot.slane %v2091, %v2094
        %v2096 = vmul.f32 %v1601, %v2095
        %v2097 = vmul.f32 %v1633, %v2095
        %v2098 = vadd.f32 %v2089, %v2096
        %v2099 = vadd.f32 %v2090, %v2097
        %v2100 = vld [vmem:[%s293 + $0x25] sm:$0x1]
        %v2101 = vlaneseq
        %v2102 = vshrl.u32 %v2101, 7
        %v2103 = vsub.s32 0, %v2102
        %v2104 = vrot.slane %v2100, %v2103
        %v2105 = vmul.f32 %v1602, %v2104
        %v2106 = vmul.f32 %v1634, %v2104
        %v2107 = vadd.f32 %v2098, %v2105
        %v2108 = vadd.f32 %v2099, %v2106
        %v2109 = vld [vmem:[%s293 + $0x27] sm:$0x1]
        %v2110 = vlaneseq
        %v2111 = vshrl.u32 %v2110, 7
        %v2112 = vsub.s32 0, %v2111
        %v2113 = vrot.slane %v2109, %v2112
        %v2114 = vmul.f32 %v1603, %v2113
        %v2115 = vmul.f32 %v1635, %v2113
        %v2116 = vadd.f32 %v2107, %v2114
        %v2117 = vadd.f32 %v2108, %v2115
        %v2118 = vld [vmem:[%s293 + $0x29] sm:$0x1]
        %v2119 = vlaneseq
        %v2120 = vshrl.u32 %v2119, 7
        %v2121 = vsub.s32 0, %v2120
        %v2122 = vrot.slane %v2118, %v2121
        %v2123 = vmul.f32 %v1604, %v2122
        %v2124 = vmul.f32 %v1636, %v2122
        %v2125 = vadd.f32 %v2116, %v2123
        %v2126 = vadd.f32 %v2117, %v2124
        %v2127 = vld [vmem:[%s293 + $0x2b] sm:$0x1]
        %v2128 = vlaneseq
        %v2129 = vshrl.u32 %v2128, 7
        %v2130 = vsub.s32 0, %v2129
        %v2131 = vrot.slane %v2127, %v2130
        %v2132 = vmul.f32 %v1605, %v2131
        %v2133 = vmul.f32 %v1637, %v2131
        %v2134 = vadd.f32 %v2125, %v2132
        %v2135 = vadd.f32 %v2126, %v2133
        %v2136 = vld [vmem:[%s293 + $0x2d] sm:$0x1]
        %v2137 = vlaneseq
        %v2138 = vshrl.u32 %v2137, 7
        %v2139 = vsub.s32 0, %v2138
        %v2140 = vrot.slane %v2136, %v2139
        %v2141 = vmul.f32 %v1606, %v2140
        %v2142 = vmul.f32 %v1638, %v2140
        %v2143 = vadd.f32 %v2134, %v2141
        %v2144 = vadd.f32 %v2135, %v2142
        %v2145 = vld [vmem:[%s293 + $0x2f] sm:$0x1]
        %v2146 = vlaneseq
        %v2147 = vshrl.u32 %v2146, 7
        %v2148 = vsub.s32 0, %v2147
        %v2149 = vrot.slane %v2145, %v2148
        %v2150 = vmul.f32 %v1607, %v2149
        %v2151 = vmul.f32 %v1639, %v2149
        %v2152 = vadd.f32 %v2143, %v2150
        %v2153 = vadd.f32 %v2144, %v2151
        %v2154 = vld [vmem:[%s293 + $0x31] sm:$0x1]
        %v2155 = vlaneseq
        %v2156 = vshrl.u32 %v2155, 7
        %v2157 = vsub.s32 0, %v2156
        %v2158 = vrot.slane %v2154, %v2157
        %v2159 = vmul.f32 %v1608, %v2158
        %v2160 = vmul.f32 %v1640, %v2158
        %v2161 = vadd.f32 %v2152, %v2159
        %v2162 = vadd.f32 %v2153, %v2160
        %v2163 = vld [vmem:[%s293 + $0x33] sm:$0x1]
        %v2164 = vlaneseq
        %v2165 = vshrl.u32 %v2164, 7
        %v2166 = vsub.s32 0, %v2165
        %v2167 = vrot.slane %v2163, %v2166
        %v2168 = vmul.f32 %v1609, %v2167
        %v2169 = vmul.f32 %v1641, %v2167
        %v2170 = vadd.f32 %v2161, %v2168
        %v2171 = vadd.f32 %v2162, %v2169
        %v2172 = vld [vmem:[%s293 + $0x35] sm:$0x1]
        %v2173 = vlaneseq
        %v2174 = vshrl.u32 %v2173, 7
        %v2175 = vsub.s32 0, %v2174
        %v2176 = vrot.slane %v2172, %v2175
        %v2177 = vmul.f32 %v1610, %v2176
        %v2178 = vmul.f32 %v1642, %v2176
        %v2179 = vadd.f32 %v2170, %v2177
        %v2180 = vadd.f32 %v2171, %v2178
        %v2181 = vld [vmem:[%s293 + $0x37] sm:$0x1]
        %v2182 = vlaneseq
        %v2183 = vshrl.u32 %v2182, 7
        %v2184 = vsub.s32 0, %v2183
        %v2185 = vrot.slane %v2181, %v2184
        %v2186 = vmul.f32 %v1611, %v2185
        %v2187 = vmul.f32 %v1643, %v2185
        %v2188 = vadd.f32 %v2179, %v2186
        %v2189 = vadd.f32 %v2180, %v2187
        %v2190 = vld [vmem:[%s293 + $0x39] sm:$0x1]
        %v2191 = vlaneseq
        %v2192 = vshrl.u32 %v2191, 7
        %v2193 = vsub.s32 0, %v2192
        %v2194 = vrot.slane %v2190, %v2193
        %v2195 = vmul.f32 %v1612, %v2194
        %v2196 = vmul.f32 %v1644, %v2194
        %v2197 = vadd.f32 %v2188, %v2195
        %v2198 = vadd.f32 %v2189, %v2196
        %v2199 = vld [vmem:[%s293 + $0x3b] sm:$0x1]
        %v2200 = vlaneseq
        %v2201 = vshrl.u32 %v2200, 7
        %v2202 = vsub.s32 0, %v2201
        %v2203 = vrot.slane %v2199, %v2202
        %v2204 = vmul.f32 %v1613, %v2203
        %v2205 = vmul.f32 %v1645, %v2203
        %v2206 = vadd.f32 %v2197, %v2204
        %v2207 = vadd.f32 %v2198, %v2205
        %v2208 = vld [vmem:[%s293 + $0x3d] sm:$0x1]
        %v2209 = vlaneseq
        %v2210 = vshrl.u32 %v2209, 7
        %v2211 = vsub.s32 0, %v2210
        %v2212 = vrot.slane %v2208, %v2211
        %v2213 = vmul.f32 %v1614, %v2212
        %v2214 = vmul.f32 %v1646, %v2212
        %v2215 = vadd.f32 %v2206, %v2213
        %v2216 = vadd.f32 %v2207, %v2214
        %v2217 = vld [vmem:[%s293 + $0x3f] sm:$0x1]
        %v2218 = vlaneseq
        %v2219 = vshrl.u32 %v2218, 7
        %v2220 = vsub.s32 0, %v2219
        %v2221 = vrot.slane %v2217, %v2220
        %v2222 = vmul.f32 %v1615, %v2221
        %v2223 = vmul.f32 %v1647, %v2221
        %v2224 = vadd.f32 %v2215, %v2222
        %v2225 = vadd.f32 %v2216, %v2223
        %s2226 = scalar_lea.vmem %s327, 16 [#allocation10]
        %2227 = vst [vmem:[%s2226] sm:$0xff] %v2224
        %2228 = vst [vmem:[%s2226 + $0x8] sm:$0xff] %v2225
        %s2229 = sand.u32 %s151, 1
        %s2230 = scalar_lea.sflag [#allocation4], %s2229
        %s2231 = sand.u32 %s151, 1
        %s2232 = smul.addr %s2231, 32
        %s2233 = scalar_lea.vmem [#allocation10], %s2232
        // Predicated region
        $region53: #{tpu_custom_call.1} parent=35 // pred_check
          %p2234 = pneg %p161
        $region54: #{tpu_custom_call.1} parent=35 // pred_check_branch
          %2236 = sbr.rel (%p2234) target = $region56
        $region55: #{tpu_custom_call.1} parent=35 // pred_region
          %s2237 = smul.u32 2, %s30
          %s2239 = ssub.s32 512, 512
          %2240 = vsyncadd %s2230, %s2239
          %s2241 = smul.addr %s2237, 2
          %s2242 = sadd.s32 %s29, %s2241
          %s2243 = smul.addr %s2242, 128
          %s2244 = scalar_lea.hbm %s4, %s2243
          %s2245 = sshll.u32 %s2233, 4
          %s2246 = int_to_ptr.vmem [resolvable:$true] %s2245
          %2251 = dma.vmem_to_hbm [thread:$0]  %s2246, 512, %s2244, %s2230, 128, 256, 8
        $region56: #{tpu_custom_call.1} parent=35 // pred_fallthru
          _
      $region36: #{tpu_custom_call.1} parent=5 // pred_fallthru
        _
      %p2252 = scmp.le.s32.totalorder 2, %s20
      // Predicated region
      $region57: #{tpu_custom_call.1} parent=5 // pred_check
        %p2253 = pneg %p2252
      $region58: #{tpu_custom_call.1} parent=5 // pred_check_branch
        %2255 = sbr.rel (%p2253) target = $region60
      $region59: #{tpu_custom_call.1} parent=5 // pred_region
        %s2256 = ssub.s32 %s20, 2
        // Predicated region
        $region61: #{tpu_custom_call.1} parent=59 // pred_check
          %p2257 = pneg %p167
        $region62: #{tpu_custom_call.1} parent=59 // pred_check_branch
          %2259 = sbr.rel (%p2257) target = $region64
        $region63: #{tpu_custom_call.1} parent=59 // pred_region
          %s2260 = sand.u32 %s152, 1
          %s2261 = scalar_lea.sflag [#allocation4], %s2260
          %s2262 = sand.u32 %s152, 1
          %s2263 = smul.addr %s2262, 32
          %s2264 = scalar_lea.vmem [#allocation10], %s2263
          %2265 = dma.done %s2261, 512
        $region64: #{tpu_custom_call.1} parent=59 // pred_fallthru
          _
      $region60: #{tpu_custom_call.1} parent=5 // pred_fallthru
        _
    $region6: #{tpu_custom_call.1} parent=1 // loop_footer
      %s24 = sadd.s32 1, %s20
    $region7: #{tpu_custom_call.1} parent=1 // loop_footer_branch
      %19 = sbr.rel target = $region3
    $region8: #{tpu_custom_call.1} parent=1 // loop_exit
      _
    %2266 = vsyncpa [#allocation3], 1
    %s2267 = scalar_lea.sflag [#allocation3], 1
    %2268 = vsyncpa %s2267, 1
    %2269 = vsyncpa [#allocation6], 1
    %s2270 = scalar_lea.sflag [#allocation6], 1
    %2271 = vsyncpa %s2270, 1
    %2272 = vsyncpa [#allocation9], 1
    %s2273 = scalar_lea.sflag [#allocation9], 1
    %2274 = vsyncpa %s2273, 1
    %2275 = vsyncpa [#allocation4], 1
    %s2276 = scalar_lea.sflag [#allocation4], 1
    %2277 = vsyncpa %s2276, 1

</llo_original>
